<compile_context>
chip_gen: v6e
topology: v6e:2x2x1
jax: 0.10.0
libtpu: 0.0.40
codegen_flags: <defaults>
</compile_context>

<pallas_src>
import math
from functools import partial

import jax
import jax.numpy as jnp
from jax import lax
from jax.experimental import pallas as pl
from jax.experimental.pallas import tpu as pltpu


def pinet_kernel(idx_i_row_ref, idx_j_row_ref, idx_i_col_ref, off_t_ref,
                 p1_t_ref, r_t_ref, centers_t_ref,
                 wt_t_ref, bt_t_ref,
                 wpp1_t_ref, bpp1_t_ref, wpp2_t_ref, bpp2_t_ref,
                 wpi_t_ref, bpi_t_ref,
                 wii_t_ref, bii_t_ref,
                 out_ref,
                 pp1_scr,
                 *, n_atoms, gamma, cutoff, dot_dtype):
    f32 = jnp.float32
    t = pl.program_id(1)          # pair-tile index inside this partition

    # ---- per-partition init: zero the accumulator, run the atom 'pp' MLP ----
    @pl.when(t == 0)
    def _():
        out_ref[...] = jnp.zeros_like(out_ref)
        h = jnp.tanh(jnp.dot(wpp1_t_ref[...], p1_t_ref[...],
                             preferred_element_type=f32) + bpp1_t_ref[...])
        pp1 = jnp.tanh(jnp.dot(wpp2_t_ref[...], h,
                               preferred_element_type=f32) + bpp2_t_ref[...])
        pp1_scr[...] = pp1.astype(pp1_scr.dtype)          # (F, n_atoms)

    tile = idx_i_row_ref.shape[1]

    # ---- one-hots for this pair tile (padding index -1 -> all-zero column) ---
    idx_i_row = idx_i_row_ref[...]                         # (1, tile) i32
    idx_j_row = idx_j_row_ref[...]                         # (1, tile) i32
    atom_iota = lax.broadcasted_iota(jnp.int32, (n_atoms, tile), 0)
    oh_i = (atom_iota == idx_i_row).astype(dot_dtype)      # (n_atoms, tile)
    oh_j = (atom_iota == idx_j_row).astype(dot_dtype)

    # ---- fused gathers: two K=n_atoms matmuls instead of four ----------------
    r_ij = (jnp.dot(r_t_ref[...], oh_j - oh_i,
                    preferred_element_type=f32)
            + off_t_ref[...])                              # (3, tile)
    prop_sum = jnp.dot(pp1_scr[...], oh_i + oh_j,
                       preferred_element_type=f32)         # (F, tile)

    # ---- radial basis * cosine cutoff -> basis transformation (Linear) -------
    d2 = jnp.sum(r_ij * r_ij, axis=0, keepdims=True)       # (1, tile)
    d = jnp.sqrt(d2)
    basis = jnp.exp(-gamma * (d - centers_t_ref[...]) ** 2)  # (n_basis, tile)
    fc = jnp.where(d < cutoff,
                   0.5 * (jnp.cos(jnp.pi * d / cutoff) + 1.0), 0.0)
    phi = (jnp.dot(wt_t_ref[...], basis * fc,
                   preferred_element_type=f32)
           + bt_t_ref[...])                                # (F, tile)

    # ---- PI layer (Linear + tanh) then II layer (Linear + tanh) --------------
    inter = prop_sum + phi
    pi1 = jnp.tanh(jnp.dot(wpi_t_ref[...], inter,
                           preferred_element_type=f32) + bpi_t_ref[...])
    ii1 = jnp.tanh(jnp.dot(wii_t_ref[...], pi1,
                           preferred_element_type=f32) + bii_t_ref[...])

    # ---- IP layer: scatter_add via one-hot matmul, K = tile on the MXU -------
    idx_i_col = idx_i_col_ref[...]                         # (tile, 1) i32
    oh_scat = (lax.broadcasted_iota(jnp.int32, (tile, n_atoms), 1)
               == idx_i_col).astype(dot_dtype)             # (tile, n_atoms)
    out_ref[...] += jnp.dot(ii1.astype(dot_dtype), oh_scat,
                            preferred_element_type=f32)    # (F, n_atoms)


def pinet_forward(Z, R, idx_i, idx_j, offsets, params, *, gamma, cutoff,
                  tile_pairs=None, num_partitions=1, dot_dtype=jnp.float32):
    f32 = jnp.float32
    n_atoms = Z.shape[0]
    n_pairs = idx_i.shape[0]
    n_basis = params["centers"].shape[1]
    out_dim = params["wt"].shape[1]
    itemsize = jnp.dtype(dot_dtype).itemsize

    # ---- pair tile: multiple of 128, one-hot tile bounded to ~4 MiB ----------
    if tile_pairs is None:
        tile_pairs = (4 * 1024 * 1024) // max(1, n_atoms * itemsize)
    tile_pairs = max(128, min(2048, (int(tile_pairs) // 128) * 128))

    # ---- pad the pair axis so it splits into num_partitions * tiles ----------
    chunk = tile_pairs * num_partitions
    n_pad = -(-n_pairs // chunk) * chunk
    pad = n_pad - n_pairs
    idx_i_p = jnp.pad(idx_i.astype(jnp.int32), (0, pad), constant_values=-1)
    idx_j_p = jnp.pad(idx_j.astype(jnp.int32), (0, pad), constant_values=-1)
    off_t = jnp.pad(offsets.astype(f32), ((0, pad), (0, 0))).T   # (3, n_pad)
    tpp = n_pad // chunk                     # pair tiles per partition

    # ---- hoist the element embedding (padding_idx=0 row is zeroed) -----------
    p1_t = jnp.take(params["emb"], Z.astype(jnp.int32), axis=0).T  # (basis, A)
    r_t = R.astype(dot_dtype).T                                    # (3, A)

    args = (idx_i_p.reshape(1, n_pad), idx_j_p.reshape(1, n_pad),
            idx_i_p.reshape(n_pad, 1), off_t,
            p1_t, r_t, params["centers"].T,
            params["wt"].T, params["bt"].T,
            params["wpp1"].T, params["bpp1"].T,
            params["wpp2"].T, params["bpp2"].T,
            params["wpi"].T, params["bpi"].T,
            params["wii"].T, params["bii"].T)

    pair_row = lambda h: pl.BlockSpec((h, tile_pairs),
                                      lambda c, t: (0, c * tpp + t))
    in_specs = [
        pair_row(1),                                                # idx_i row
        pair_row(1),                                                # idx_j row
        pl.BlockSpec((tile_pairs, 1), lambda c, t: (c * tpp + t, 0)),  # idx_i col
        pair_row(3),                                                # offsets^T
    ] + [pl.BlockSpec(a.shape, lambda c, t: (0, 0)) for a in args[4:]]

    out_specs = pl.BlockSpec((None, out_dim, n_atoms), lambda c, t: (c, 0, 0))

    # ---- VMEM budget for the per-tile working set -----------------------------
    onehot = tile_pairs * n_atoms * itemsize
    pair_feat = tile_pairs * max(out_dim, n_basis, 8) * 4
    est = (8 * onehot + 14 * pair_feat
           + 4 * n_atoms * (n_basis + out_dim + 8) * 4
           + (2 << 20))
    vmem_limit = int(min(max(est, 16 * 1024 * 1024), 48 * 1024 * 1024))

    kernel = partial(pinet_kernel, n_atoms=n_atoms, gamma=gamma,
                     cutoff=cutoff, dot_dtype=dot_dtype)

    partial_out = pl.pallas_call(
        kernel,
        out_shape=jax.ShapeDtypeStruct((num_partitions, out_dim, n_atoms), f32),
        grid_spec=pltpu.PrefetchScalarGridSpec(
            num_scalar_prefetch=0,
            grid=(num_partitions, tpp),
            in_specs=in_specs,
            out_specs=out_specs,
            scratch_shapes=[pltpu.VMEM((out_dim, n_atoms), dot_dtype)]),
        compiler_params=pltpu.CompilerParams(
            dimension_semantics=("parallel", "arbitrary"),
            vmem_limit_bytes=vmem_limit),
    )(*args)

    out = jnp.sum(partial_out, axis=0).T       # (n_atoms, F)
    # restore the singleton "rank" axis of the PyTorch module: (n_atoms, 1, F)
    return out[:, None, :]


def pinet_reference(Z, R, idx_i, idx_j, offsets, params, *, gamma, cutoff,
                    dot_dtype=jnp.float32):
    """Pure-JAX reference; dot_dtype mimics the kernel's one-hot-dot casts."""
    f32 = jnp.float32
    Rd = R.astype(dot_dtype).astype(f32)
    r_ij = Rd[idx_j] - Rd[idx_i] + offsets
    d_ij = jnp.linalg.norm(r_ij, axis=-1, keepdims=True)
    basis = jnp.exp(-gamma * (d_ij - params["centers"]) ** 2)
    fc = jnp.where(d_ij < cutoff, 0.5 * (jnp.cos(jnp.pi * d_ij / cutoff) + 1.0), 0.0)
    phi = (basis * fc) @ params["wt"] + params["bt"]
    p1 = params["emb"][Z]
    h = jnp.tanh(p1 @ params["wpp1"] + params["bpp1"])
    pp1 = jnp.tanh(h @ params["wpp2"] + params["bpp2"])
    pp1d = pp1.astype(dot_dtype).astype(f32)
    inter = pp1d[idx_i] + phi + pp1d[idx_j]
    pi1 = jnp.tanh(inter @ params["wpi"] + params["bpi"])
    ii1 = jnp.tanh(pi1 @ params["wii"] + params["bii"])
    ii1d = ii1.astype(dot_dtype).astype(f32)
    out = jnp.zeros((Z.shape[0], ii1.shape[-1]), f32).at[idx_i].add(ii1d)
    return out[:, None, :]


def init_params(key, n_atom_basis, max_z, cutoff):
    """Deterministic synthetic parameters (shapes from PiNet.__init__)."""
    ks = jax.random.split(key, 8)

    def lin(k, fan_in, fan_out):
        s = 1.0 / math.sqrt(fan_in)
        return (jax.random.normal(k, (fan_in, fan_out), jnp.float32) * s,
                jnp.zeros((1, fan_out), jnp.float32))

    # pp_nodes = [n_atom_basis, 16, 16]; pi_nodes = [16, 16]; ii_nodes = [16, 16]
    F = 16
    emb = jax.random.normal(ks[0], (max_z, n_atom_basis), jnp.float32) * 0.1
    emb = emb.at[0].set(0.0)                      # padding_idx = 0
    wt, bt = lin(ks[1], n_atom_basis, F)          # basis_transformation
    wpp1, bpp1 = lin(ks[2], n_atom_basis, F)
    wpp2, bpp2 = lin(ks[3], F, F)
    wpi, bpi = lin(ks[4], F, F)
    wii, bii = lin(ks[5], F, F)
    centers = jnp.linspace(0.0, cutoff, n_atom_basis,
                           dtype=jnp.float32).reshape(1, n_atom_basis)
    return dict(emb=emb, centers=centers, wt=wt, bt=bt,
                wpp1=wpp1, bpp1=bpp1, wpp2=wpp2, bpp2=bpp2,
                wpi=wpi, bpi=bpi, wii=wii, bii=bii)


if __name__ == "__main__":
    key = jax.random.PRNGKey(0)
    k_r, k_z, k_p = jax.random.split(key, 3)

    n_atoms = 12
    n_pairs = 300            # not a multiple of the pair tile -> exercises padding
    n_atom_basis = 16
    max_z = 101
    cutoff = 5.0
    delta = cutoff / (n_atom_basis - 1)
    gamma = 1.0 / (2.0 * delta * delta)

    # deterministic small example inputs
    Z = jax.random.randint(k_z, (n_atoms,), 1, 10, dtype=jnp.int32)
    R = jax.random.uniform(k_r, (n_atoms, 3), jnp.float32) * 3.0
    base = jnp.arange(n_pairs, dtype=jnp.int32)
    idx_i = base % n_atoms
    idx_j = (idx_i + 1 + (base // n_atoms) % (n_atoms - 1)) % n_atoms   # != idx_i
    offsets = jnp.zeros((n_pairs, 3), jnp.float32)

    params = init_params(k_p, n_atom_basis, max_z, cutoff)

    # ---- f32 path: exact one-hot gather/scatter; grid (2 partitions x 2 tiles)
    out = pinet_forward(Z, R, idx_i, idx_j, offsets, params,
                        gamma=gamma, cutoff=cutoff,
                        tile_pairs=128, num_partitions=2)
    out = jax.block_until_ready(out)
    ref = pinet_reference(Z, R, idx_i, idx_j, offsets, params,
                          gamma=gamma, cutoff=cutoff)
    assert out.shape == (n_atoms, 1, 16), out.shape
    assert jnp.allclose(out, ref, rtol=1e-3, atol=1e-3), \
        float(jnp.max(jnp.abs(out - ref)))

    # ---- bf16 one-hot / gather-feature path (native MXU path on v6e/v7x) -----
    out_bf16 = pinet_forward(Z, R, idx_i, idx_j, offsets, params,
                             gamma=gamma, cutoff=cutoff,
                             tile_pairs=128, num_partitions=2,
                             dot_dtype=jnp.bfloat16)
    out_bf16 = jax.block_until_ready(out_bf16)
    ref_bf16 = pinet_reference(Z, R, idx_i, idx_j, offsets, params,
                               gamma=gamma, cutoff=cutoff,
                               dot_dtype=jnp.bfloat16)
    assert jnp.allclose(out_bf16, ref_bf16, rtol=5e-3, atol=5e-3), \
        float(jnp.max(jnp.abs(out_bf16 - ref_bf16)))

    print("KERNEL_OK")
</pallas_src>

<mosaic_0001>
module attributes {stable_mosaic.version = 11 : i64} {
  func.func @pinet_kernel(%arg0: i32, %arg1: i32, %arg2: memref<1x128xi32, #tpu.memory_space<vmem>>, %arg3: memref<1x128xi32, #tpu.memory_space<vmem>>, %arg4: memref<128x1xi32, #tpu.memory_space<vmem>>, %arg5: memref<3x128xf32, #tpu.memory_space<vmem>>, %arg6: memref<16x12xf32, #tpu.memory_space<vmem>>, %arg7: memref<3x12xf32, #tpu.memory_space<vmem>>, %arg8: memref<16x1xf32, #tpu.memory_space<vmem>>, %arg9: memref<16x16xf32, #tpu.memory_space<vmem>>, %arg10: memref<16x1xf32, #tpu.memory_space<vmem>>, %arg11: memref<16x16xf32, #tpu.memory_space<vmem>>, %arg12: memref<16x1xf32, #tpu.memory_space<vmem>>, %arg13: memref<16x16xf32, #tpu.memory_space<vmem>>, %arg14: memref<16x1xf32, #tpu.memory_space<vmem>>, %arg15: memref<16x16xf32, #tpu.memory_space<vmem>>, %arg16: memref<16x1xf32, #tpu.memory_space<vmem>>, %arg17: memref<16x16xf32, #tpu.memory_space<vmem>>, %arg18: memref<16x1xf32, #tpu.memory_space<vmem>>, %arg19: memref<1x16x12xf32, #tpu.memory_space<vmem>>, %arg20: memref<16x12xf32, #tpu.memory_space<vmem>>) attributes {dimension_semantics = [#tpu.dimension_semantics<parallel>, #tpu.dimension_semantics<arbitrary>], iteration_bounds = array<i64: 2, 2>, scalar_prefetch = 0 : i64, scratch_operands = 1 : i64, tpu.core_type = #tpu.core_type<tc>, window_params = [{transform_indices = @transform_0, window_bounds = array<i64: 1, 128>}, {transform_indices = @transform_1, window_bounds = array<i64: 1, 128>}, {transform_indices = @transform_2, window_bounds = array<i64: 128, 1>}, {transform_indices = @transform_3, window_bounds = array<i64: 3, 128>}, {pipeline_mode = #tpu.pipeline_mode<synchronous>, transform_indices = @transform_4, window_bounds = array<i64: 16, 12>}, {pipeline_mode = #tpu.pipeline_mode<synchronous>, transform_indices = @transform_5, window_bounds = array<i64: 3, 12>}, {pipeline_mode = #tpu.pipeline_mode<synchronous>, transform_indices = @transform_6, window_bounds = array<i64: 16, 1>}, {pipeline_mode = #tpu.pipeline_mode<synchronous>, transform_indices = @transform_7, window_bounds = array<i64: 16, 16>}, {pipeline_mode = #tpu.pipeline_mode<synchronous>, transform_indices = @transform_8, window_bounds = array<i64: 16, 1>}, {pipeline_mode = #tpu.pipeline_mode<synchronous>, transform_indices = @transform_9, window_bounds = array<i64: 16, 16>}, {pipeline_mode = #tpu.pipeline_mode<synchronous>, transform_indices = @transform_10, window_bounds = array<i64: 16, 1>}, {pipeline_mode = #tpu.pipeline_mode<synchronous>, transform_indices = @transform_11, window_bounds = array<i64: 16, 16>}, {pipeline_mode = #tpu.pipeline_mode<synchronous>, transform_indices = @transform_12, window_bounds = array<i64: 16, 1>}, {pipeline_mode = #tpu.pipeline_mode<synchronous>, transform_indices = @transform_13, window_bounds = array<i64: 16, 16>}, {pipeline_mode = #tpu.pipeline_mode<synchronous>, transform_indices = @transform_14, window_bounds = array<i64: 16, 1>}, {pipeline_mode = #tpu.pipeline_mode<synchronous>, transform_indices = @transform_15, window_bounds = array<i64: 16, 16>}, {pipeline_mode = #tpu.pipeline_mode<synchronous>, transform_indices = @transform_16, window_bounds = array<i64: 16, 1>}, {transform_indices = @transform_17, window_bounds = array<i64: 1, 16, 12>}]} {
    %c0_i32 = arith.constant 0 : i32
    %0 = arith.cmpi eq, %arg1, %c0_i32 : i32
    %1 = arith.extui %0 : i1 to i32
    %c0_i32_0 = arith.constant 0 : i32
    %2 = arith.cmpi ne, %1, %c0_i32_0 : i32
    scf.if %2 {
      %cst_45 = arith.constant 0.000000e+00 : f32
      %80 = vector.broadcast %cst_45 : f32 to vector<16x12xf32>
      %c0_46 = arith.constant 0 : index
      %c0_47 = arith.constant 0 : index
      %c0_48 = arith.constant 0 : index
      %81 = vector.load %arg19[%c0_46, %c0_47, %c0_48] : memref<1x16x12xf32, #tpu.memory_space<vmem>>, vector<1x16x12xf32>
      %82 = vector.shape_cast %81 : vector<1x16x12xf32> to vector<16x12xf32>
      %83 = vector.shape_cast %80 : vector<16x12xf32> to vector<1x16x12xf32>
      tpu.vector_store %arg19[%c0_46, %c0_47, %c0_48], %83 {strides = array<i32>} : memref<1x16x12xf32, #tpu.memory_space<vmem>>, vector<1x16x12xf32>,
      %c0_49 = arith.constant 0 : index
      %c0_50 = arith.constant 0 : index
      %84 = vector.load %arg11[%c0_49, %c0_50] : memref<16x16xf32, #tpu.memory_space<vmem>>, vector<16x16xf32>
      %c0_51 = arith.constant 0 : index
      %c0_52 = arith.constant 0 : index
      %85 = vector.load %arg6[%c0_51, %c0_52] : memref<16x12xf32, #tpu.memory_space<vmem>>, vector<16x12xf32>
      %cst_53 = arith.constant dense<0.000000e+00> : vector<16x12xf32>
      %86 = tpu.matmul %84, %85, %cst_53 {dimension_numbers = #tpu.dot_dimension_numbers<[1], [0], [0], [1], [0, 0, 1, 1], [], []>} : vector<16x16xf32>, vector<16x12xf32>, vector<16x12xf32> -> vector<16x12xf32>
      %c0_54 = arith.constant 0 : index
      %c0_55 = arith.constant 0 : index
      %87 = vector.load %arg12[%c0_54, %c0_55] : memref<16x1xf32, #tpu.memory_space<vmem>>, vector<16x1xf32>
      %88 = vector.broadcast %87 : vector<16x1xf32> to vector<16x12xf32>
      %89 = arith.addf %86, %88 : vector<16x12xf32>
      %90 = math.tanh %89 : vector<16x12xf32>
      %c0_56 = arith.constant 0 : index
      %c0_57 = arith.constant 0 : index
      %91 = vector.load %arg13[%c0_56, %c0_57] : memref<16x16xf32, #tpu.memory_space<vmem>>, vector<16x16xf32>
      %cst_58 = arith.constant dense<0.000000e+00> : vector<16x12xf32>
      %92 = tpu.matmul %91, %90, %cst_58 {dimension_numbers = #tpu.dot_dimension_numbers<[1], [0], [0], [1], [0, 0, 1, 1], [], []>} : vector<16x16xf32>, vector<16x12xf32>, vector<16x12xf32> -> vector<16x12xf32>
      %c0_59 = arith.constant 0 : index
      %c0_60 = arith.constant 0 : index
      %93 = vector.load %arg14[%c0_59, %c0_60] : memref<16x1xf32, #tpu.memory_space<vmem>>, vector<16x1xf32>
      %94 = vector.broadcast %93 : vector<16x1xf32> to vector<16x12xf32>
      %95 = arith.addf %92, %94 : vector<16x12xf32>
      %96 = math.tanh %95 : vector<16x12xf32>
      %c0_61 = arith.constant 0 : index
      %c0_62 = arith.constant 0 : index
      %97 = vector.load %arg20[%c0_61, %c0_62] : memref<16x12xf32, #tpu.memory_space<vmem>>, vector<16x12xf32>
      tpu.vector_store %arg20[%c0_61, %c0_62], %96 {strides = array<i32>} : memref<16x12xf32, #tpu.memory_space<vmem>>, vector<16x12xf32>,
    } else {
    }
    %c0 = arith.constant 0 : index
    %c0_1 = arith.constant 0 : index
    %3 = vector.load %arg2[%c0, %c0_1] : memref<1x128xi32, #tpu.memory_space<vmem>>, vector<1x128xi32>
    %c0_2 = arith.constant 0 : index
    %c0_3 = arith.constant 0 : index
    %4 = vector.load %arg3[%c0_2, %c0_3] : memref<1x128xi32, #tpu.memory_space<vmem>>, vector<1x128xi32>
    %5 = tpu.iota {dimensions = array<i32: 0>} : vector<12x128xi32>
    %6 = vector.broadcast %3 : vector<1x128xi32> to vector<12x128xi32>
    %7 = arith.cmpi eq, %5, %6 : vector<12x128xi32>
    %8 = arith.extui %7 : vector<12x128xi1> to vector<12x128xi32>
    %9 = arith.sitofp %8 : vector<12x128xi32> to vector<12x128xf32>
    %10 = vector.broadcast %4 : vector<1x128xi32> to vector<12x128xi32>
    %11 = arith.cmpi eq, %5, %10 : vector<12x128xi32>
    %12 = arith.extui %11 : vector<12x128xi1> to vector<12x128xi32>
    %13 = arith.sitofp %12 : vector<12x128xi32> to vector<12x128xf32>
    %c0_4 = arith.constant 0 : index
    %c0_5 = arith.constant 0 : index
    %14 = vector.load %arg7[%c0_4, %c0_5] : memref<3x12xf32, #tpu.memory_space<vmem>>, vector<3x12xf32>
    %15 = arith.subf %13, %9 : vector<12x128xf32>
    %cst = arith.constant dense<0.000000e+00> : vector<3x128xf32>
    %16 = tpu.matmul %14, %15, %cst {dimension_numbers = #tpu.dot_dimension_numbers<[1], [0], [0], [1], [0, 0, 1, 1], [], []>} : vector<3x12xf32>, vector<12x128xf32>, vector<3x128xf32> -> vector<3x128xf32>
    %c0_6 = arith.constant 0 : index
    %c0_7 = arith.constant 0 : index
    %17 = vector.load %arg5[%c0_6, %c0_7] : memref<3x128xf32, #tpu.memory_space<vmem>>, vector<3x128xf32>
    %18 = arith.addf %16, %17 : vector<3x128xf32>
    %c0_8 = arith.constant 0 : index
    %c0_9 = arith.constant 0 : index
    %19 = vector.load %arg20[%c0_8, %c0_9] : memref<16x12xf32, #tpu.memory_space<vmem>>, vector<16x12xf32>
    %20 = arith.addf %9, %13 : vector<12x128xf32>
    %cst_10 = arith.constant dense<0.000000e+00> : vector<16x128xf32>
    %21 = tpu.matmul %19, %20, %cst_10 {dimension_numbers = #tpu.dot_dimension_numbers<[1], [0], [0], [1], [0, 0, 1, 1], [], []>} : vector<16x12xf32>, vector<12x128xf32>, vector<16x128xf32> -> vector<16x128xf32>
    %22 = arith.mulf %18, %18 : vector<3x128xf32>
    %cst_11 = arith.constant dense<0.000000e+00> : vector<128xf32>
    %23 = vector.multi_reduction <add>, %22, %cst_11 [0] : vector<3x128xf32> to vector<128xf32>
    %24 = vector.shape_cast %23 : vector<128xf32> to vector<1x128xf32>
    %25 = math.sqrt %24 : vector<1x128xf32>
    %c0_12 = arith.constant 0 : index
    %c0_13 = arith.constant 0 : index
    %26 = vector.load %arg8[%c0_12, %c0_13] : memref<16x1xf32, #tpu.memory_space<vmem>>, vector<16x1xf32>
    %27 = vector.broadcast %25 : vector<1x128xf32> to vector<16x128xf32>
    %28 = vector.broadcast %26 : vector<16x1xf32> to vector<16x128xf32>
    %29 = arith.subf %27, %28 : vector<16x128xf32>
    %30 = arith.mulf %29, %29 : vector<16x128xf32>
    %cst_14 = arith.constant -4.500000e+00 : f32
    %31 = vector.broadcast %cst_14 : f32 to vector<16x128xf32>
    %32 = arith.mulf %31, %30 : vector<16x128xf32>
    %33 = math.exp %32 : vector<16x128xf32>
    %cst_15 = arith.constant 5.000000e+00 : f32
    %34 = vector.broadcast %cst_15 : f32 to vector<1x128xf32>
    %35 = arith.cmpf olt, %25, %34 : vector<1x128xf32>
    %cst_16 = arith.constant 3.14159274 : f32
    %36 = vector.broadcast %cst_16 : f32 to vector<1x128xf32>
    %37 = arith.mulf %36, %25 : vector<1x128xf32>
    %cst_17 = arith.constant 5.000000e+00 : f32
    %38 = vector.broadcast %cst_17 : f32 to vector<1x128xf32>
    %39 = arith.divf %37, %38 : vector<1x128xf32>
    %40 = math.cos %39 : vector<1x128xf32>
    %cst_18 = arith.constant 1.000000e+00 : f32
    %41 = vector.broadcast %cst_18 : f32 to vector<1x128xf32>
    %42 = arith.addf %40, %41 : vector<1x128xf32>
    %cst_19 = arith.constant 5.000000e-01 : f32
    %43 = vector.broadcast %cst_19 : f32 to vector<1x128xf32>
    %44 = arith.mulf %43, %42 : vector<1x128xf32>
    %cst_20 = arith.constant 0.000000e+00 : f32
    %45 = vector.broadcast %cst_20 : f32 to vector<1x128xf32>
    %46 = arith.select %35, %44, %45 : vector<1x128xi1>, vector<1x128xf32>
    %c0_21 = arith.constant 0 : index
    %c0_22 = arith.constant 0 : index
    %47 = vector.load %arg9[%c0_21, %c0_22] : memref<16x16xf32, #tpu.memory_space<vmem>>, vector<16x16xf32>
    %48 = vector.broadcast %46 : vector<1x128xf32> to vector<16x128xf32>
    %49 = arith.mulf %33, %48 : vector<16x128xf32>
    %cst_23 = arith.constant dense<0.000000e+00> : vector<16x128xf32>
    %50 = tpu.matmul %47, %49, %cst_23 {dimension_numbers = #tpu.dot_dimension_numbers<[1], [0], [0], [1], [0, 0, 1, 1], [], []>} : vector<16x16xf32>, vector<16x128xf32>, vector<16x128xf32> -> vector<16x128xf32>
    %c0_24 = arith.constant 0 : index
    %c0_25 = arith.constant 0 : index
    %51 = vector.load %arg10[%c0_24, %c0_25] : memref<16x1xf32, #tpu.memory_space<vmem>>, vector<16x1xf32>
    %52 = vector.broadcast %51 : vector<16x1xf32> to vector<16x128xf32>
    %53 = arith.addf %50, %52 : vector<16x128xf32>
    %54 = arith.addf %21, %53 : vector<16x128xf32>
    %c0_26 = arith.constant 0 : index
    %c0_27 = arith.constant 0 : index
    %55 = vector.load %arg15[%c0_26, %c0_27] : memref<16x16xf32, #tpu.memory_space<vmem>>, vector<16x16xf32>
    %cst_28 = arith.constant dense<0.000000e+00> : vector<16x128xf32>
    %56 = tpu.matmul %55, %54, %cst_28 {dimension_numbers = #tpu.dot_dimension_numbers<[1], [0], [0], [1], [0, 0, 1, 1], [], []>} : vector<16x16xf32>, vector<16x128xf32>, vector<16x128xf32> -> vector<16x128xf32>
    %c0_29 = arith.constant 0 : index
    %c0_30 = arith.constant 0 : index
    %57 = vector.load %arg16[%c0_29, %c0_30] : memref<16x1xf32, #tpu.memory_space<vmem>>, vector<16x1xf32>
    %58 = vector.broadcast %57 : vector<16x1xf32> to vector<16x128xf32>
    %59 = arith.addf %56, %58 : vector<16x128xf32>
    %60 = math.tanh %59 : vector<16x128xf32>
    %c0_31 = arith.constant 0 : index
    %c0_32 = arith.constant 0 : index
    %61 = vector.load %arg17[%c0_31, %c0_32] : memref<16x16xf32, #tpu.memory_space<vmem>>, vector<16x16xf32>
    %cst_33 = arith.constant dense<0.000000e+00> : vector<16x128xf32>
    %62 = tpu.matmul %61, %60, %cst_33 {dimension_numbers = #tpu.dot_dimension_numbers<[1], [0], [0], [1], [0, 0, 1, 1], [], []>} : vector<16x16xf32>, vector<16x128xf32>, vector<16x128xf32> -> vector<16x128xf32>
    %c0_34 = arith.constant 0 : index
    %c0_35 = arith.constant 0 : index
    %63 = vector.load %arg18[%c0_34, %c0_35] : memref<16x1xf32, #tpu.memory_space<vmem>>, vector<16x1xf32>
    %64 = vector.broadcast %63 : vector<16x1xf32> to vector<16x128xf32>
    %65 = arith.addf %62, %64 : vector<16x128xf32>
    %66 = math.tanh %65 : vector<16x128xf32>
    %c0_36 = arith.constant 0 : index
    %c0_37 = arith.constant 0 : index
    %67 = vector.load %arg4[%c0_36, %c0_37] : memref<128x1xi32, #tpu.memory_space<vmem>>, vector<128x1xi32>
    %68 = tpu.iota {dimensions = array<i32: 1>} : vector<128x12xi32>
    %69 = vector.broadcast %67 : vector<128x1xi32> to vector<128x12xi32>
    %70 = arith.cmpi eq, %68, %69 : vector<128x12xi32>
    %71 = arith.extui %70 : vector<128x12xi1> to vector<128x12xi32>
    %72 = arith.sitofp %71 : vector<128x12xi32> to vector<128x12xf32>
    %c0_38 = arith.constant 0 : index
    %c0_39 = arith.constant 0 : index
    %c0_40 = arith.constant 0 : index
    %73 = vector.load %arg19[%c0_38, %c0_39, %c0_40] : memref<1x16x12xf32, #tpu.memory_space<vmem>>, vector<1x16x12xf32>
    %74 = vector.shape_cast %73 : vector<1x16x12xf32> to vector<16x12xf32>
    %cst_41 = arith.constant dense<0.000000e+00> : vector<16x12xf32>
    %75 = tpu.matmul %66, %72, %cst_41 {dimension_numbers = #tpu.dot_dimension_numbers<[1], [0], [0], [1], [0, 0, 1, 1], [], []>} : vector<16x128xf32>, vector<128x12xf32>, vector<16x12xf32> -> vector<16x12xf32>
    %76 = arith.addf %74, %75 : vector<16x12xf32>
    %c0_42 = arith.constant 0 : index
    %c0_43 = arith.constant 0 : index
    %c0_44 = arith.constant 0 : index
    %77 = vector.load %arg19[%c0_42, %c0_43, %c0_44] : memref<1x16x12xf32, #tpu.memory_space<vmem>>, vector<1x16x12xf32>
    %78 = vector.shape_cast %77 : vector<1x16x12xf32> to vector<16x12xf32>
    %79 = vector.shape_cast %76 : vector<16x12xf32> to vector<1x16x12xf32>
    tpu.vector_store %arg19[%c0_42, %c0_43, %c0_44], %79 {strides = array<i32>} : memref<1x16x12xf32, #tpu.memory_space<vmem>>, vector<1x16x12xf32>,
    return
  }
  func.func @transform_0(%arg0: i32, %arg1: i32) -> (i32, i32) {
    %c2_i32 = arith.constant 2 : i32
    %0 = arith.muli %arg0, %c2_i32 : i32
    %1 = arith.addi %0, %arg1 : i32
    %c0_i32 = arith.constant 0 : i32
    %c0_i32_0 = arith.constant 0 : i32
    return %c0_i32, %1 : i32, i32
  }
  func.func @transform_1(%arg0: i32, %arg1: i32) -> (i32, i32) {
    %c2_i32 = arith.constant 2 : i32
    %0 = arith.muli %arg0, %c2_i32 : i32
    %1 = arith.addi %0, %arg1 : i32
    %c0_i32 = arith.constant 0 : i32
    %c0_i32_0 = arith.constant 0 : i32
    return %c0_i32, %1 : i32, i32
  }
  func.func @transform_2(%arg0: i32, %arg1: i32) -> (i32, i32) {
    %c2_i32 = arith.constant 2 : i32
    %0 = arith.muli %arg0, %c2_i32 : i32
    %1 = arith.addi %0, %arg1 : i32
    %c0_i32 = arith.constant 0 : i32
    %c0_i32_0 = arith.constant 0 : i32
    return %1, %c0_i32 : i32, i32
  }
  func.func @transform_3(%arg0: i32, %arg1: i32) -> (i32, i32) {
    %c2_i32 = arith.constant 2 : i32
    %0 = arith.muli %arg0, %c2_i32 : i32
    %1 = arith.addi %0, %arg1 : i32
    %c0_i32 = arith.constant 0 : i32
    %c0_i32_0 = arith.constant 0 : i32
    return %c0_i32, %1 : i32, i32
  }
  func.func @transform_4(%arg0: i32, %arg1: i32) -> (i32, i32) {
    %c0_i32 = arith.constant 0 : i32
    %c0_i32_0 = arith.constant 0 : i32
    %c0_i32_1 = arith.constant 0 : i32
    return %c0_i32, %c0_i32_0 : i32, i32
  }
  func.func @transform_5(%arg0: i32, %arg1: i32) -> (i32, i32) {
    %c0_i32 = arith.constant 0 : i32
    %c0_i32_0 = arith.constant 0 : i32
    %c0_i32_1 = arith.constant 0 : i32
    return %c0_i32, %c0_i32_0 : i32, i32
  }
  func.func @transform_6(%arg0: i32, %arg1: i32) -> (i32, i32) {
    %c0_i32 = arith.constant 0 : i32
    %c0_i32_0 = arith.constant 0 : i32
    %c0_i32_1 = arith.constant 0 : i32
    return %c0_i32, %c0_i32_0 : i32, i32
  }
  func.func @transform_7(%arg0: i32, %arg1: i32) -> (i32, i32) {
    %c0_i32 = arith.constant 0 : i32
    %c0_i32_0 = arith.constant 0 : i32
    %c0_i32_1 = arith.constant 0 : i32
    return %c0_i32, %c0_i32_0 : i32, i32
  }
  func.func @transform_8(%arg0: i32, %arg1: i32) -> (i32, i32) {
    %c0_i32 = arith.constant 0 : i32
    %c0_i32_0 = arith.constant 0 : i32
    %c0_i32_1 = arith.constant 0 : i32
    return %c0_i32, %c0_i32_0 : i32, i32
  }
  func.func @transform_9(%arg0: i32, %arg1: i32) -> (i32, i32) {
    %c0_i32 = arith.constant 0 : i32
    %c0_i32_0 = arith.constant 0 : i32
    %c0_i32_1 = arith.constant 0 : i32
    return %c0_i32, %c0_i32_0 : i32, i32
  }
  func.func @transform_10(%arg0: i32, %arg1: i32) -> (i32, i32) {
    %c0_i32 = arith.constant 0 : i32
    %c0_i32_0 = arith.constant 0 : i32
    %c0_i32_1 = arith.constant 0 : i32
    return %c0_i32, %c0_i32_0 : i32, i32
  }
  func.func @transform_11(%arg0: i32, %arg1: i32) -> (i32, i32) {
    %c0_i32 = arith.constant 0 : i32
    %c0_i32_0 = arith.constant 0 : i32
    %c0_i32_1 = arith.constant 0 : i32
    return %c0_i32, %c0_i32_0 : i32, i32
  }
  func.func @transform_12(%arg0: i32, %arg1: i32) -> (i32, i32) {
    %c0_i32 = arith.constant 0 : i32
    %c0_i32_0 = arith.constant 0 : i32
    %c0_i32_1 = arith.constant 0 : i32
    return %c0_i32, %c0_i32_0 : i32, i32
  }
  func.func @transform_13(%arg0: i32, %arg1: i32) -> (i32, i32) {
    %c0_i32 = arith.constant 0 : i32
    %c0_i32_0 = arith.constant 0 : i32
    %c0_i32_1 = arith.constant 0 : i32
    return %c0_i32, %c0_i32_0 : i32, i32
  }
  func.func @transform_14(%arg0: i32, %arg1: i32) -> (i32, i32) {
    %c0_i32 = arith.constant 0 : i32
    %c0_i32_0 = arith.constant 0 : i32
    %c0_i32_1 = arith.constant 0 : i32
    return %c0_i32, %c0_i32_0 : i32, i32
  }
  func.func @transform_15(%arg0: i32, %arg1: i32) -> (i32, i32) {
    %c0_i32 = arith.constant 0 : i32
    %c0_i32_0 = arith.constant 0 : i32
    %c0_i32_1 = arith.constant 0 : i32
    return %c0_i32, %c0_i32_0 : i32, i32
  }
  func.func @transform_16(%arg0: i32, %arg1: i32) -> (i32, i32) {
    %c0_i32 = arith.constant 0 : i32
    %c0_i32_0 = arith.constant 0 : i32
    %c0_i32_1 = arith.constant 0 : i32
    return %c0_i32, %c0_i32_0 : i32, i32
  }
  func.func @transform_17(%arg0: i32, %arg1: i32) -> (i32, i32, i32) {
    %c0_i32 = arith.constant 0 : i32
    %c0_i32_0 = arith.constant 0 : i32
    %c0_i32_1 = arith.constant 0 : i32
    return %arg0, %c0_i32, %c0_i32_0 : i32, i32, i32
  }
}

</mosaic_0001>

<llo_original>
// kernel: tpu_custom_call.1
$region0: #{tpu_custom_call.1}
  #allocation0 [shape = 'u32[]', space=smem, size = 0x4, offset = 0x4, fixed_abs, tag = 'smem constant byte address 0x4 - core index']
  #allocation1 [shape = 'u32[144,128]{1,0:T(1,128)}', space=vmem, size = 0x12000, scoped, tag = 'internal scratch']
  #allocation2 [shape = 'f32[16,12]{1,0:T(8,128)}', space=vmem, size = 0x2000, scoped, tag = 'scratch operand']
  %s0 = inlined_call_operand.vmem [shape: s32[1,512], index: 0, kind: input, shape index: {}]
  %s1 = inlined_call_operand.vmem [shape: s32[1,512], index: 1, kind: input, shape index: {}]
  %s2 = inlined_call_operand.vmem [shape: s32[512,1], index: 2, kind: input, shape index: {}]
  %s3 = inlined_call_operand.vmem [shape: f32[3,512], index: 3, kind: input, shape index: {}]
  %s4 = inlined_call_operand.vmem [shape: f32[16,12], index: 4, kind: input, shape index: {}]
  %s5 = inlined_call_operand.vmem [shape: f32[3,12], index: 5, kind: input, shape index: {}]
  %s6 = inlined_call_operand.vmem [shape: f32[16,1], index: 6, kind: input, shape index: {}]
  %s7 = inlined_call_operand.vmem [shape: f32[16,16], index: 7, kind: input, shape index: {}]
  %s8 = inlined_call_operand.vmem [shape: f32[16,1], index: 8, kind: input, shape index: {}]
  %s9 = inlined_call_operand.vmem [shape: f32[16,16], index: 9, kind: input, shape index: {}]
  %s10 = inlined_call_operand.vmem [shape: f32[16,1], index: 10, kind: input, shape index: {}]
  %s11 = inlined_call_operand.vmem [shape: f32[16,16], index: 11, kind: input, shape index: {}]
  %s12 = inlined_call_operand.vmem [shape: f32[16,1], index: 12, kind: input, shape index: {}]
  %s13 = inlined_call_operand.vmem [shape: f32[16,16], index: 13, kind: input, shape index: {}]
  %s14 = inlined_call_operand.vmem [shape: f32[16,1], index: 14, kind: input, shape index: {}]
  %s15 = inlined_call_operand.vmem [shape: f32[16,16], index: 15, kind: input, shape index: {}]
  %s16 = inlined_call_operand.vmem [shape: f32[16,1], index: 16, kind: input, shape index: {}]
  %s17 = inlined_call_operand.vmem [shape: f32[2,16,12], index: 17, kind: output, shape index: {}]
  %s18 = sld [smem:[#allocation0]]
  $region105: #{tpu_custom_call.1} parent=0
    _
  %s20 = ssub.s32 1, %s18
  %s21 = scalar_select 0, %s20, %s18
  loop: start=0, step=1, limit=6
  $region2: #{tpu_custom_call.1} parent=0 // loop_pre_header
    _
  $region3: #{tpu_custom_call.1} parent=0 // loop_header
    %s23 = sphi 0, %s27
    %p24 = scmp.ge.s32.totalorder %s23, 6
    %s30 = sphi 0, %s42
    %s31 = sphi 0, %s38
    %s32 = sphi 0, %s30
    %s33 = sphi 0, %s31
    %s34 = sphi 0, %s32
    %s35 = sphi 0, %s33
    %s49 = sphi 0, %s51
    %s52 = sphi 0, %s49
    %s53 = sphi 0, %s52
    %s69 = sphi 0, %s53
    %s79 = sphi 0, %s81
    %s82 = sphi 0, %s79
    %s83 = sphi 0, %s82
    %s99 = sphi 0, %s83
    %s109 = sphi 0, %s111
    %s112 = sphi 0, %s109
    %s113 = sphi 0, %s112
    %s129 = sphi 0, %s113
    %s139 = sphi 0, %s141
    %s142 = sphi 0, %s139
    %s143 = sphi 0, %s142
    %s159 = sphi 0, %s143
    %s163 = sphi 0, %s163
    %s165 = sphi 0, %s163
    %s166 = sphi 0, %s165
    %s180 = sphi 0, %s166
    %s184 = sphi 0, %s184
    %s186 = sphi 0, %s184
    %s187 = sphi 0, %s186
    %s201 = sphi 0, %s187
    %s205 = sphi 0, %s205
    %s207 = sphi 0, %s205
    %s208 = sphi 0, %s207
    %s222 = sphi 0, %s208
    %s226 = sphi 0, %s226
    %s228 = sphi 0, %s226
    %s229 = sphi 0, %s228
    %s243 = sphi 0, %s229
    %s247 = sphi 0, %s247
    %s249 = sphi 0, %s247
    %s250 = sphi 0, %s249
    %s264 = sphi 0, %s250
    %s268 = sphi 0, %s268
    %s270 = sphi 0, %s268
    %s271 = sphi 0, %s270
    %s285 = sphi 0, %s271
    %s289 = sphi 0, %s289
    %s291 = sphi 0, %s289
    %s292 = sphi 0, %s291
    %s306 = sphi 0, %s292
    %s310 = sphi 0, %s310
    %s312 = sphi 0, %s310
    %s313 = sphi 0, %s312
    %s327 = sphi 0, %s313
    %s331 = sphi 0, %s331
    %s333 = sphi 0, %s331
    %s334 = sphi 0, %s333
    %s348 = sphi 0, %s334
    %s352 = sphi 0, %s352
    %s354 = sphi 0, %s352
    %s355 = sphi 0, %s354
    %s369 = sphi 0, %s355
    %s373 = sphi 0, %s373
    %s375 = sphi 0, %s373
    %s376 = sphi 0, %s375
    %s390 = sphi 0, %s376
    %s394 = sphi 0, %s394
    %s396 = sphi 0, %s394
    %s397 = sphi 0, %s396
    %s411 = sphi 0, %s397
    %s415 = sphi 0, %s415
    %s417 = sphi 0, %s415
    %s418 = sphi 0, %s417
    %s432 = sphi 0, %s418
    %s438 = sphi 0, %s440
    %s441 = sphi 0, %s438
    %s442 = sphi 0, %s441
    %s458 = sphi 0, %s442
  $region4: #{tpu_custom_call.1} parent=0 // loop_header_branch
    %26 = sbr.rel (%p24) target = $region8
  $region5: #{tpu_custom_call.1} parent=0 // loop_body
    %s28 = ssub.s32 %s23, 1
    %s29 = ssub.s32 %s23, 2
    %s36 = sadd.s32 1, %s31
    %p37 = scmp.ge.s32.totalorder %s36, 2
    %s38 = scalar_select %p37, 0, %s36
    %s39 = sadd.s32 1, %s30
    %s40 = scalar_select %p37, %s39, %s30
    %p41 = scmp.ge.s32.totalorder %s40, 2
    %s42 = scalar_select %p41, 0, %s40
    %s43 = smul.u32 %s30, 2
    %s44 = sadd.s32 %s43, %s31
    %s45 = smul.u32 %s42, 2
    %s46 = sadd.s32 %s45, %s38
    %s47 = ssub.s32 %s44, %s46
    %p48 = scmp.eq.s32.totalorder %s47, 0
    %s50 = sadd.s32 %s49, 1
    %s51 = scalar_select %p48, %s49, %s50
    %p54 = pneg %p48
    %p55 = scmp.eq.s32.totalorder %s23, 3
    %p56 = por %p54, %p55
    %p57 = scmp.ne.s32.totalorder %s49, %s52
    %p58 = scmp.eq.s32.totalorder %s23, 0
    %p59 = por %p57, %p58
    %p60 = scmp.ne.s32.totalorder %s49, %s52
    %p61 = scmp.eq.s32.totalorder %s28, 3
    %p62 = por %p60, %p61
    %p63 = scmp.ne.s32.totalorder %s52, %s53
    %p64 = scmp.eq.s32.totalorder %s28, 0
    %p65 = por %p63, %p64
    %p66 = scmp.ne.s32.totalorder %s52, %s53
    %p67 = scmp.eq.s32.totalorder %s29, 3
    %p68 = por %p66, %p67
    %p70 = scmp.ne.s32.totalorder %s53, %s69
    %p71 = scmp.eq.s32.totalorder %s29, 0
    %p72 = por %p70, %p71
    %s73 = smul.u32 %s30, 2
    %s74 = sadd.s32 %s73, %s31
    %s75 = smul.u32 %s42, 2
    %s76 = sadd.s32 %s75, %s38
    %s77 = ssub.s32 %s74, %s76
    %p78 = scmp.eq.s32.totalorder %s77, 0
    %s80 = sadd.s32 %s79, 1
    %s81 = scalar_select %p78, %s79, %s80
    %p84 = pneg %p78
    %p85 = scmp.eq.s32.totalorder %s23, 3
    %p86 = por %p84, %p85
    %p87 = scmp.ne.s32.totalorder %s79, %s82
    %p88 = scmp.eq.s32.totalorder %s23, 0
    %p89 = por %p87, %p88
    %p90 = scmp.ne.s32.totalorder %s79, %s82
    %p91 = scmp.eq.s32.totalorder %s28, 3
    %p92 = por %p90, %p91
    %p93 = scmp.ne.s32.totalorder %s82, %s83
    %p94 = scmp.eq.s32.totalorder %s28, 0
    %p95 = por %p93, %p94
    %p96 = scmp.ne.s32.totalorder %s82, %s83
    %p97 = scmp.eq.s32.totalorder %s29, 3
    %p98 = por %p96, %p97
    %p100 = scmp.ne.s32.totalorder %s83, %s99
    %p101 = scmp.eq.s32.totalorder %s29, 0
    %p102 = por %p100, %p101
    %s103 = smul.u32 %s30, 2
    %s104 = sadd.s32 %s103, %s31
    %s105 = smul.u32 %s42, 2
    %s106 = sadd.s32 %s105, %s38
    %s107 = ssub.s32 %s104, %s106
    %p108 = scmp.eq.s32.totalorder %s107, 0
    %s110 = sadd.s32 %s109, 1
    %s111 = scalar_select %p108, %s109, %s110
    %p114 = pneg %p108
    %p115 = scmp.eq.s32.totalorder %s23, 3
    %p116 = por %p114, %p115
    %p117 = scmp.ne.s32.totalorder %s109, %s112
    %p118 = scmp.eq.s32.totalorder %s23, 0
    %p119 = por %p117, %p118
    %p120 = scmp.ne.s32.totalorder %s109, %s112
    %p121 = scmp.eq.s32.totalorder %s28, 3
    %p122 = por %p120, %p121
    %p123 = scmp.ne.s32.totalorder %s112, %s113
    %p124 = scmp.eq.s32.totalorder %s28, 0
    %p125 = por %p123, %p124
    %p126 = scmp.ne.s32.totalorder %s112, %s113
    %p127 = scmp.eq.s32.totalorder %s29, 3
    %p128 = por %p126, %p127
    %p130 = scmp.ne.s32.totalorder %s113, %s129
    %p131 = scmp.eq.s32.totalorder %s29, 0
    %p132 = por %p130, %p131
    %s133 = smul.u32 %s30, 2
    %s134 = sadd.s32 %s133, %s31
    %s135 = smul.u32 %s42, 2
    %s136 = sadd.s32 %s135, %s38
    %s137 = ssub.s32 %s134, %s136
    %p138 = scmp.eq.s32.totalorder %s137, 0
    %s140 = sadd.s32 %s139, 1
    %s141 = scalar_select %p138, %s139, %s140
    %p144 = pneg %p138
    %p145 = scmp.eq.s32.totalorder %s23, 3
    %p146 = por %p144, %p145
    %p147 = scmp.ne.s32.totalorder %s139, %s142
    %p148 = scmp.eq.s32.totalorder %s23, 0
    %p149 = por %p147, %p148
    %p150 = scmp.ne.s32.totalorder %s139, %s142
    %p151 = scmp.eq.s32.totalorder %s28, 3
    %p152 = por %p150, %p151
    %p153 = scmp.ne.s32.totalorder %s142, %s143
    %p154 = scmp.eq.s32.totalorder %s28, 0
    %p155 = por %p153, %p154
    %p156 = scmp.ne.s32.totalorder %s142, %s143
    %p157 = scmp.eq.s32.totalorder %s29, 3
    %p158 = por %p156, %p157
    %p160 = scmp.ne.s32.totalorder %s143, %s159
    %p161 = scmp.eq.s32.totalorder %s29, 0
    %p162 = por %p160, %p161
    %s164 = sadd.s32 %s163, 1
    %p167 = scmp.eq.s32.totalorder %s23, 3
    %p168 = scmp.ne.s32.totalorder %s163, %s165
    %p169 = scmp.eq.s32.totalorder %s23, 0
    %p170 = por %p168, %p169
    %p171 = scmp.ne.s32.totalorder %s163, %s165
    %p172 = scmp.eq.s32.totalorder %s28, 3
    %p173 = por %p171, %p172
    %p174 = scmp.ne.s32.totalorder %s165, %s166
    %p175 = scmp.eq.s32.totalorder %s28, 0
    %p176 = por %p174, %p175
    %p177 = scmp.ne.s32.totalorder %s165, %s166
    %p178 = scmp.eq.s32.totalorder %s29, 3
    %p179 = por %p177, %p178
    %p181 = scmp.ne.s32.totalorder %s166, %s180
    %p182 = scmp.eq.s32.totalorder %s29, 0
    %p183 = por %p181, %p182
    %s185 = sadd.s32 %s184, 1
    %p188 = scmp.eq.s32.totalorder %s23, 3
    %p189 = scmp.ne.s32.totalorder %s184, %s186
    %p190 = scmp.eq.s32.totalorder %s23, 0
    %p191 = por %p189, %p190
    %p192 = scmp.ne.s32.totalorder %s184, %s186
    %p193 = scmp.eq.s32.totalorder %s28, 3
    %p194 = por %p192, %p193
    %p195 = scmp.ne.s32.totalorder %s186, %s187
    %p196 = scmp.eq.s32.totalorder %s28, 0
    %p197 = por %p195, %p196
    %p198 = scmp.ne.s32.totalorder %s186, %s187
    %p199 = scmp.eq.s32.totalorder %s29, 3
    %p200 = por %p198, %p199
    %p202 = scmp.ne.s32.totalorder %s187, %s201
    %p203 = scmp.eq.s32.totalorder %s29, 0
    %p204 = por %p202, %p203
    %s206 = sadd.s32 %s205, 1
    %p209 = scmp.eq.s32.totalorder %s23, 3
    %p210 = scmp.ne.s32.totalorder %s205, %s207
    %p211 = scmp.eq.s32.totalorder %s23, 0
    %p212 = por %p210, %p211
    %p213 = scmp.ne.s32.totalorder %s205, %s207
    %p214 = scmp.eq.s32.totalorder %s28, 3
    %p215 = por %p213, %p214
    %p216 = scmp.ne.s32.totalorder %s207, %s208
    %p217 = scmp.eq.s32.totalorder %s28, 0
    %p218 = por %p216, %p217
    %p219 = scmp.ne.s32.totalorder %s207, %s208
    %p220 = scmp.eq.s32.totalorder %s29, 3
    %p221 = por %p219, %p220
    %p223 = scmp.ne.s32.totalorder %s208, %s222
    %p224 = scmp.eq.s32.totalorder %s29, 0
    %p225 = por %p223, %p224
    %s227 = sadd.s32 %s226, 1
    %p230 = scmp.eq.s32.totalorder %s23, 3
    %p231 = scmp.ne.s32.totalorder %s226, %s228
    %p232 = scmp.eq.s32.totalorder %s23, 0
    %p233 = por %p231, %p232
    %p234 = scmp.ne.s32.totalorder %s226, %s228
    %p235 = scmp.eq.s32.totalorder %s28, 3
    %p236 = por %p234, %p235
    %p237 = scmp.ne.s32.totalorder %s228, %s229
    %p238 = scmp.eq.s32.totalorder %s28, 0
    %p239 = por %p237, %p238
    %p240 = scmp.ne.s32.totalorder %s228, %s229
    %p241 = scmp.eq.s32.totalorder %s29, 3
    %p242 = por %p240, %p241
    %p244 = scmp.ne.s32.totalorder %s229, %s243
    %p245 = scmp.eq.s32.totalorder %s29, 0
    %p246 = por %p244, %p245
    %s248 = sadd.s32 %s247, 1
    %p251 = scmp.eq.s32.totalorder %s23, 3
    %p252 = scmp.ne.s32.totalorder %s247, %s249
    %p253 = scmp.eq.s32.totalorder %s23, 0
    %p254 = por %p252, %p253
    %p255 = scmp.ne.s32.totalorder %s247, %s249
    %p256 = scmp.eq.s32.totalorder %s28, 3
    %p257 = por %p255, %p256
    %p258 = scmp.ne.s32.totalorder %s249, %s250
    %p259 = scmp.eq.s32.totalorder %s28, 0
    %p260 = por %p258, %p259
    %p261 = scmp.ne.s32.totalorder %s249, %s250
    %p262 = scmp.eq.s32.totalorder %s29, 3
    %p263 = por %p261, %p262
    %p265 = scmp.ne.s32.totalorder %s250, %s264
    %p266 = scmp.eq.s32.totalorder %s29, 0
    %p267 = por %p265, %p266
    %s269 = sadd.s32 %s268, 1
    %p272 = scmp.eq.s32.totalorder %s23, 3
    %p273 = scmp.ne.s32.totalorder %s268, %s270
    %p274 = scmp.eq.s32.totalorder %s23, 0
    %p275 = por %p273, %p274
    %p276 = scmp.ne.s32.totalorder %s268, %s270
    %p277 = scmp.eq.s32.totalorder %s28, 3
    %p278 = por %p276, %p277
    %p279 = scmp.ne.s32.totalorder %s270, %s271
    %p280 = scmp.eq.s32.totalorder %s28, 0
    %p281 = por %p279, %p280
    %p282 = scmp.ne.s32.totalorder %s270, %s271
    %p283 = scmp.eq.s32.totalorder %s29, 3
    %p284 = por %p282, %p283
    %p286 = scmp.ne.s32.totalorder %s271, %s285
    %p287 = scmp.eq.s32.totalorder %s29, 0
    %p288 = por %p286, %p287
    %s290 = sadd.s32 %s289, 1
    %p293 = scmp.eq.s32.totalorder %s23, 3
    %p294 = scmp.ne.s32.totalorder %s289, %s291
    %p295 = scmp.eq.s32.totalorder %s23, 0
    %p296 = por %p294, %p295
    %p297 = scmp.ne.s32.totalorder %s289, %s291
    %p298 = scmp.eq.s32.totalorder %s28, 3
    %p299 = por %p297, %p298
    %p300 = scmp.ne.s32.totalorder %s291, %s292
    %p301 = scmp.eq.s32.totalorder %s28, 0
    %p302 = por %p300, %p301
    %p303 = scmp.ne.s32.totalorder %s291, %s292
    %p304 = scmp.eq.s32.totalorder %s29, 3
    %p305 = por %p303, %p304
    %p307 = scmp.ne.s32.totalorder %s292, %s306
    %p308 = scmp.eq.s32.totalorder %s29, 0
    %p309 = por %p307, %p308
    %s311 = sadd.s32 %s310, 1
    %p314 = scmp.eq.s32.totalorder %s23, 3
    %p315 = scmp.ne.s32.totalorder %s310, %s312
    %p316 = scmp.eq.s32.totalorder %s23, 0
    %p317 = por %p315, %p316
    %p318 = scmp.ne.s32.totalorder %s310, %s312
    %p319 = scmp.eq.s32.totalorder %s28, 3
    %p320 = por %p318, %p319
    %p321 = scmp.ne.s32.totalorder %s312, %s313
    %p322 = scmp.eq.s32.totalorder %s28, 0
    %p323 = por %p321, %p322
    %p324 = scmp.ne.s32.totalorder %s312, %s313
    %p325 = scmp.eq.s32.totalorder %s29, 3
    %p326 = por %p324, %p325
    %p328 = scmp.ne.s32.totalorder %s313, %s327
    %p329 = scmp.eq.s32.totalorder %s29, 0
    %p330 = por %p328, %p329
    %s332 = sadd.s32 %s331, 1
    %p335 = scmp.eq.s32.totalorder %s23, 3
    %p336 = scmp.ne.s32.totalorder %s331, %s333
    %p337 = scmp.eq.s32.totalorder %s23, 0
    %p338 = por %p336, %p337
    %p339 = scmp.ne.s32.totalorder %s331, %s333
    %p340 = scmp.eq.s32.totalorder %s28, 3
    %p341 = por %p339, %p340
    %p342 = scmp.ne.s32.totalorder %s333, %s334
    %p343 = scmp.eq.s32.totalorder %s28, 0
    %p344 = por %p342, %p343
    %p345 = scmp.ne.s32.totalorder %s333, %s334
    %p346 = scmp.eq.s32.totalorder %s29, 3
    %p347 = por %p345, %p346
    %p349 = scmp.ne.s32.totalorder %s334, %s348
    %p350 = scmp.eq.s32.totalorder %s29, 0
    %p351 = por %p349, %p350
    %s353 = sadd.s32 %s352, 1
    %p356 = scmp.eq.s32.totalorder %s23, 3
    %p357 = scmp.ne.s32.totalorder %s352, %s354
    %p358 = scmp.eq.s32.totalorder %s23, 0
    %p359 = por %p357, %p358
    %p360 = scmp.ne.s32.totalorder %s352, %s354
    %p361 = scmp.eq.s32.totalorder %s28, 3
    %p362 = por %p360, %p361
    %p363 = scmp.ne.s32.totalorder %s354, %s355
    %p364 = scmp.eq.s32.totalorder %s28, 0
    %p365 = por %p363, %p364
    %p366 = scmp.ne.s32.totalorder %s354, %s355
    %p367 = scmp.eq.s32.totalorder %s29, 3
    %p368 = por %p366, %p367
    %p370 = scmp.ne.s32.totalorder %s355, %s369
    %p371 = scmp.eq.s32.totalorder %s29, 0
    %p372 = por %p370, %p371
    %s374 = sadd.s32 %s373, 1
    %p377 = scmp.eq.s32.totalorder %s23, 3
    %p378 = scmp.ne.s32.totalorder %s373, %s375
    %p379 = scmp.eq.s32.totalorder %s23, 0
    %p380 = por %p378, %p379
    %p381 = scmp.ne.s32.totalorder %s373, %s375
    %p382 = scmp.eq.s32.totalorder %s28, 3
    %p383 = por %p381, %p382
    %p384 = scmp.ne.s32.totalorder %s375, %s376
    %p385 = scmp.eq.s32.totalorder %s28, 0
    %p386 = por %p384, %p385
    %p387 = scmp.ne.s32.totalorder %s375, %s376
    %p388 = scmp.eq.s32.totalorder %s29, 3
    %p389 = por %p387, %p388
    %p391 = scmp.ne.s32.totalorder %s376, %s390
    %p392 = scmp.eq.s32.totalorder %s29, 0
    %p393 = por %p391, %p392
    %s395 = sadd.s32 %s394, 1
    %p398 = scmp.eq.s32.totalorder %s23, 3
    %p399 = scmp.ne.s32.totalorder %s394, %s396
    %p400 = scmp.eq.s32.totalorder %s23, 0
    %p401 = por %p399, %p400
    %p402 = scmp.ne.s32.totalorder %s394, %s396
    %p403 = scmp.eq.s32.totalorder %s28, 3
    %p404 = por %p402, %p403
    %p405 = scmp.ne.s32.totalorder %s396, %s397
    %p406 = scmp.eq.s32.totalorder %s28, 0
    %p407 = por %p405, %p406
    %p408 = scmp.ne.s32.totalorder %s396, %s397
    %p409 = scmp.eq.s32.totalorder %s29, 3
    %p410 = por %p408, %p409
    %p412 = scmp.ne.s32.totalorder %s397, %s411
    %p413 = scmp.eq.s32.totalorder %s29, 0
    %p414 = por %p412, %p413
    %s416 = sadd.s32 %s415, 1
    %p419 = scmp.eq.s32.totalorder %s23, 3
    %p420 = scmp.ne.s32.totalorder %s415, %s417
    %p421 = scmp.eq.s32.totalorder %s23, 0
    %p422 = por %p420, %p421
    %p423 = scmp.ne.s32.totalorder %s415, %s417
    %p424 = scmp.eq.s32.totalorder %s28, 3
    %p425 = por %p423, %p424
    %p426 = scmp.ne.s32.totalorder %s417, %s418
    %p427 = scmp.eq.s32.totalorder %s28, 0
    %p428 = por %p426, %p427
    %p429 = scmp.ne.s32.totalorder %s417, %s418
    %p430 = scmp.eq.s32.totalorder %s29, 3
    %p431 = por %p429, %p430
    %p433 = scmp.ne.s32.totalorder %s418, %s432
    %p434 = scmp.eq.s32.totalorder %s29, 0
    %p435 = por %p433, %p434
    %s436 = ssub.s32 %s30, %s42
    %p437 = scmp.eq.s32.totalorder %s436, 0
    %s439 = sadd.s32 %s438, 1
    %s440 = scalar_select %p437, %s438, %s439
    %p443 = pneg %p437
    %p444 = scmp.eq.s32.totalorder %s23, 3
    %p445 = por %p443, %p444
    %p446 = scmp.ne.s32.totalorder %s438, %s441
    %p447 = scmp.eq.s32.totalorder %s23, 0
    %p448 = por %p446, %p447
    %p449 = scmp.ne.s32.totalorder %s438, %s441
    %p450 = scmp.eq.s32.totalorder %s28, 3
    %p451 = por %p449, %p450
    %p452 = scmp.ne.s32.totalorder %s441, %s442
    %p453 = scmp.eq.s32.totalorder %s28, 0
    %p454 = por %p452, %p453
    %p455 = scmp.ne.s32.totalorder %s441, %s442
    %p456 = scmp.eq.s32.totalorder %s29, 3
    %p457 = por %p455, %p456
    %p459 = scmp.ne.s32.totalorder %s442, %s458
    %p460 = scmp.eq.s32.totalorder %s29, 0
    %p461 = por %p459, %p460
    %p462 = scmp.le.s32.totalorder 1, %s23
    %p463 = scmp.lt.s32.totalorder %s23, 5
    %p464 = pnand %p462, %p463
    %p465 = pneg %p464
    // Predicated region
    $region9: #{tpu_custom_call.1} parent=5 // pred_check
      _
    $region10: #{tpu_custom_call.1} parent=5 // pred_check_branch
      %467 = sbr.rel (%p464) target = $region12
    $region11: #{tpu_custom_call.1} parent=5 // pred_region
      %s468 = ssub.s32 %s23, 1
      // Predicated region
      $region13: #{tpu_custom_call.1} parent=11 // pred_check
        %p469 = pneg %p176
      $region14: #{tpu_custom_call.1} parent=11 // pred_check_branch
        %471 = sbr.rel (%p469) target = $region16
      $region15: #{tpu_custom_call.1} parent=11 // pred_region
        _
      $region16: #{tpu_custom_call.1} parent=11 // pred_fallthru
        _
      // Predicated region
      $region17: #{tpu_custom_call.1} parent=11 // pred_check
        %p472 = pneg %p197
      $region18: #{tpu_custom_call.1} parent=11 // pred_check_branch
        %474 = sbr.rel (%p472) target = $region20
      $region19: #{tpu_custom_call.1} parent=11 // pred_region
        _
      $region20: #{tpu_custom_call.1} parent=11 // pred_fallthru
        _
      // Predicated region
      $region21: #{tpu_custom_call.1} parent=11 // pred_check
        %p475 = pneg %p218
      $region22: #{tpu_custom_call.1} parent=11 // pred_check_branch
        %477 = sbr.rel (%p475) target = $region24
      $region23: #{tpu_custom_call.1} parent=11 // pred_region
        _
      $region24: #{tpu_custom_call.1} parent=11 // pred_fallthru
        _
      // Predicated region
      $region25: #{tpu_custom_call.1} parent=11 // pred_check
        %p478 = pneg %p239
      $region26: #{tpu_custom_call.1} parent=11 // pred_check_branch
        %480 = sbr.rel (%p478) target = $region28
      $region27: #{tpu_custom_call.1} parent=11 // pred_region
        _
      $region28: #{tpu_custom_call.1} parent=11 // pred_fallthru
        _
      // Predicated region
      $region29: #{tpu_custom_call.1} parent=11 // pred_check
        %p481 = pneg %p260
      $region30: #{tpu_custom_call.1} parent=11 // pred_check_branch
        %483 = sbr.rel (%p481) target = $region32
      $region31: #{tpu_custom_call.1} parent=11 // pred_region
        _
      $region32: #{tpu_custom_call.1} parent=11 // pred_fallthru
        _
      // Predicated region
      $region33: #{tpu_custom_call.1} parent=11 // pred_check
        %p484 = pneg %p281
      $region34: #{tpu_custom_call.1} parent=11 // pred_check_branch
        %486 = sbr.rel (%p484) target = $region36
      $region35: #{tpu_custom_call.1} parent=11 // pred_region
        _
      $region36: #{tpu_custom_call.1} parent=11 // pred_fallthru
        _
      // Predicated region
      $region37: #{tpu_custom_call.1} parent=11 // pred_check
        %p487 = pneg %p302
      $region38: #{tpu_custom_call.1} parent=11 // pred_check_branch
        %489 = sbr.rel (%p487) target = $region40
      $region39: #{tpu_custom_call.1} parent=11 // pred_region
        _
      $region40: #{tpu_custom_call.1} parent=11 // pred_fallthru
        _
      // Predicated region
      $region41: #{tpu_custom_call.1} parent=11 // pred_check
        %p490 = pneg %p323
      $region42: #{tpu_custom_call.1} parent=11 // pred_check_branch
        %492 = sbr.rel (%p490) target = $region44
      $region43: #{tpu_custom_call.1} parent=11 // pred_region
        _
      $region44: #{tpu_custom_call.1} parent=11 // pred_fallthru
        _
      // Predicated region
      $region45: #{tpu_custom_call.1} parent=11 // pred_check
        %p493 = pneg %p344
      $region46: #{tpu_custom_call.1} parent=11 // pred_check_branch
        %495 = sbr.rel (%p493) target = $region48
      $region47: #{tpu_custom_call.1} parent=11 // pred_region
        _
      $region48: #{tpu_custom_call.1} parent=11 // pred_fallthru
        _
      // Predicated region
      $region49: #{tpu_custom_call.1} parent=11 // pred_check
        %p496 = pneg %p365
      $region50: #{tpu_custom_call.1} parent=11 // pred_check_branch
        %498 = sbr.rel (%p496) target = $region52
      $region51: #{tpu_custom_call.1} parent=11 // pred_region
        _
      $region52: #{tpu_custom_call.1} parent=11 // pred_fallthru
        _
      // Predicated region
      $region53: #{tpu_custom_call.1} parent=11 // pred_check
        %p499 = pneg %p386
      $region54: #{tpu_custom_call.1} parent=11 // pred_check_branch
        %501 = sbr.rel (%p499) target = $region56
      $region55: #{tpu_custom_call.1} parent=11 // pred_region
        _
      $region56: #{tpu_custom_call.1} parent=11 // pred_fallthru
        _
      // Predicated region
      $region57: #{tpu_custom_call.1} parent=11 // pred_check
        %p502 = pneg %p407
      $region58: #{tpu_custom_call.1} parent=11 // pred_check_branch
        %504 = sbr.rel (%p502) target = $region60
      $region59: #{tpu_custom_call.1} parent=11 // pred_region
        _
      $region60: #{tpu_custom_call.1} parent=11 // pred_fallthru
        _
      // Predicated region
      $region61: #{tpu_custom_call.1} parent=11 // pred_check
        %p505 = pneg %p428
      $region62: #{tpu_custom_call.1} parent=11 // pred_check_branch
        %507 = sbr.rel (%p505) target = $region64
      $region63: #{tpu_custom_call.1} parent=11 // pred_region
        _
      $region64: #{tpu_custom_call.1} parent=11 // pred_fallthru
        _
    $region12: #{tpu_custom_call.1} parent=5 // pred_fallthru
      _
    %p508 = scmp.lt.s32.totalorder %s23, 4
    // Predicated region
    $region65: #{tpu_custom_call.1} parent=5 // pred_check
      %p509 = pneg %p508
    $region66: #{tpu_custom_call.1} parent=5 // pred_check_branch
      %511 = sbr.rel (%p509) target = $region68
    $region67: #{tpu_custom_call.1} parent=5 // pred_region
      // Predicated region
      $region69: #{tpu_custom_call.1} parent=67 // pred_check
        %p512 = pneg %p59
      $region70: #{tpu_custom_call.1} parent=67 // pred_check_branch
        %514 = sbr.rel (%p512) target = $region72
      $region71: #{tpu_custom_call.1} parent=67 // pred_region
        %s515 = smul.u32 %s30, 2
        %s516 = sadd.s32 %s515, %s31
        %p517 = scmp.lt.s32.totalorder %s516, 3
        %s518 = scalar_select %p517, %s516, 3
        %s519 = scalar_lea.vmem %s0, %s518
        %s520 = smul.u32 %s30, 2
        %s521 = sadd.s32 %s520, %s31
      $region72: #{tpu_custom_call.1} parent=67 // pred_fallthru
        _
      // Predicated region
      $region73: #{tpu_custom_call.1} parent=67 // pred_check
        %p522 = pneg %p89
      $region74: #{tpu_custom_call.1} parent=67 // pred_check_branch
        %524 = sbr.rel (%p522) target = $region76
      $region75: #{tpu_custom_call.1} parent=67 // pred_region
        %s525 = smul.u32 %s30, 2
        %s526 = sadd.s32 %s525, %s31
        %p527 = scmp.lt.s32.totalorder %s526, 3
        %s528 = scalar_select %p527, %s526, 3
        %s529 = scalar_lea.vmem %s1, %s528
        %s530 = smul.u32 %s30, 2
        %s531 = sadd.s32 %s530, %s31
      $region76: #{tpu_custom_call.1} parent=67 // pred_fallthru
        _
      // Predicated region
      $region77: #{tpu_custom_call.1} parent=67 // pred_check
        %p532 = pneg %p119
      $region78: #{tpu_custom_call.1} parent=67 // pred_check_branch
        %534 = sbr.rel (%p532) target = $region80
      $region79: #{tpu_custom_call.1} parent=67 // pred_region
        %s535 = smul.u32 %s30, 2
        %s536 = sadd.s32 %s535, %s31
        %s537 = smul.u32 16, %s536
        %p538 = scmp.lt.s32.totalorder %s537, 63
        %s539 = scalar_select %p538, %s537, 63
        %s540 = smul.addr %s539, 8
        %s541 = scalar_lea.vmem %s2, %s540
        %s542 = smul.u32 %s30, 2
        %s543 = sadd.s32 %s542, %s31
        %s544 = smul.u32 16, %s543
      $region80: #{tpu_custom_call.1} parent=67 // pred_fallthru
        _
      // Predicated region
      $region81: #{tpu_custom_call.1} parent=67 // pred_check
        %p545 = pneg %p149
      $region82: #{tpu_custom_call.1} parent=67 // pred_check_branch
        %547 = sbr.rel (%p545) target = $region84
      $region83: #{tpu_custom_call.1} parent=67 // pred_region
        %s548 = smul.u32 %s30, 2
        %s549 = sadd.s32 %s548, %s31
        %p550 = scmp.lt.s32.totalorder %s549, 3
        %s551 = scalar_select %p550, %s549, 3
        %s552 = smul.addr %s551, 4
        %s553 = scalar_lea.vmem %s3, %s552
        %s554 = smul.u32 %s30, 2
        %s555 = sadd.s32 %s554, %s31
      $region84: #{tpu_custom_call.1} parent=67 // pred_fallthru
        _
    $region68: #{tpu_custom_call.1} parent=5 // pred_fallthru
      _
    %p556 = scmp.le.s32.totalorder 1, %s23
    %p557 = scmp.lt.s32.totalorder %s23, 5
    %p558 = pnand %p556, %p557
    %p559 = pneg %p558
    // Predicated region
    $region85: #{tpu_custom_call.1} parent=5 // pred_check
      _
    $region86: #{tpu_custom_call.1} parent=5 // pred_check_branch
      %561 = sbr.rel (%p558) target = $region88
    $region87: #{tpu_custom_call.1} parent=5 // pred_region
      %s562 = ssub.s32 %s23, 1
      %s563 = smul.u32 %s32, 2
      %s564 = sadd.s32 %s563, %s33
      %p565 = scmp.lt.s32.totalorder %s564, 3
      %s566 = scalar_select %p565, %s564, 3
      %s567 = scalar_lea.vmem %s0, %s566
      %p568 = pneg %p65
      %p569 = pneg %p62
      %s570 = smul.u32 %s32, 2
      %s571 = sadd.s32 %s570, %s33
      %p572 = scmp.lt.s32.totalorder %s571, 3
      %s573 = scalar_select %p572, %s571, 3
      %s574 = scalar_lea.vmem %s1, %s573
      %p575 = pneg %p95
      %p576 = pneg %p92
      %s577 = smul.u32 %s32, 2
      %s578 = sadd.s32 %s577, %s33
      %s579 = smul.u32 16, %s578
      %p580 = scmp.lt.s32.totalorder %s579, 63
      %s581 = scalar_select %p580, %s579, 63
      %s582 = smul.addr %s581, 8
      %s583 = scalar_lea.vmem %s2, %s582
      %p584 = pneg %p125
      %p585 = pneg %p122
      %s586 = smul.u32 %s32, 2
      %s587 = sadd.s32 %s586, %s33
      %p588 = scmp.lt.s32.totalorder %s587, 3
      %s589 = scalar_select %p588, %s587, 3
      %s590 = smul.addr %s589, 4
      %s591 = scalar_lea.vmem %s3, %s590
      %p592 = pneg %p155
      %p593 = pneg %p152
      %p594 = pneg %p176
      %p595 = pneg %p173
      %p596 = pneg %p197
      %p597 = pneg %p194
      %p598 = pneg %p218
      %p599 = pneg %p215
      %p600 = pneg %p239
      %p601 = pneg %p236
      %p602 = pneg %p260
      %p603 = pneg %p257
      %p604 = pneg %p281
      %p605 = pneg %p278
      %p606 = pneg %p302
      %p607 = pneg %p299
      %p608 = pneg %p323
      %p609 = pneg %p320
      %p610 = pneg %p344
      %p611 = pneg %p341
      %p612 = pneg %p365
      %p613 = pneg %p362
      %p614 = pneg %p386
      %p615 = pneg %p383
      %p616 = pneg %p407
      %p617 = pneg %p404
      %p618 = pneg %p428
      %p619 = pneg %p425
      %p620 = pneg %p454
      %p621 = pneg %p451
      %p622 = scmp.lt.s32.totalorder %s32, 1
      %s623 = scalar_select %p622, %s32, 1
      %s624 = smul.addr %s623, 2
      %s625 = smul.addr %s624, 8
      %s626 = scalar_lea.vmem %s17, %s625
      %s627 = smul.u32 %s32, 2
      %s628 = sadd.s32 %s627, %s33
      %p629 = scmp.lt.s32.totalorder %s628, 3
      %s630 = scalar_select %p629, %s628, 3
      %s631 = scalar_lea.vmem %s0, %s630
      %s632 = smul.u32 %s32, 2
      %s633 = sadd.s32 %s632, %s33
      %s634 = smul.u32 %s32, 2
      %s635 = sadd.s32 %s634, %s33
      %p636 = scmp.lt.s32.totalorder %s635, 3
      %s637 = scalar_select %p636, %s635, 3
      %s638 = scalar_lea.vmem %s1, %s637
      %s639 = smul.u32 %s32, 2
      %s640 = sadd.s32 %s639, %s33
      %s641 = smul.u32 %s32, 2
      %s642 = sadd.s32 %s641, %s33
      %s643 = smul.u32 16, %s642
      %p644 = scmp.lt.s32.totalorder %s643, 63
      %s645 = scalar_select %p644, %s643, 63
      %s646 = smul.addr %s645, 8
      %s647 = scalar_lea.vmem %s2, %s646
      %s648 = smul.u32 %s32, 2
      %s649 = sadd.s32 %s648, %s33
      %s650 = smul.u32 16, %s649
      %s651 = smul.u32 %s32, 2
      %s652 = sadd.s32 %s651, %s33
      %p653 = scmp.lt.s32.totalorder %s652, 3
      %s654 = scalar_select %p653, %s652, 3
      %s655 = smul.addr %s654, 4
      %s656 = scalar_lea.vmem %s3, %s655
      %s657 = smul.u32 %s32, 2
      %s658 = sadd.s32 %s657, %s33
      %p659 = scmp.lt.s32.totalorder %s32, 1
      %s660 = scalar_select %p659, %s32, 1
      %s661 = smul.addr %s660, 2
      %s662 = smul.addr %s661, 8
      %s663 = scalar_lea.vmem %s17, %s662
      %p664 = scmp.eq.s32.totalorder %s33, 0
      // Predicated region
      $region89: #{tpu_custom_call.1} parent=87 // pred_check
        %p665 = pneg %p664
      $region90: #{tpu_custom_call.1} parent=87 // pred_check_branch
        %667 = sbr.rel (%p665) target = $region92
      $region91: #{tpu_custom_call.1} parent=87 // pred_region
        %vm668 = vcmask 97280
        %669 = vst.msk [vmem:[%s663] sm:$0xff] %vm668, 0.0
        %670 = vst.msk [vmem:[%s663 + $0x8] sm:$0xff] %vm668, 0.0
        %v671 = vld [vmem:[%s9] sm:$0xff]
        %v672 = vld [vmem:[%s9 + $0x8] sm:$0xff]
        %v673 = vld [vmem:[%s4] sm:$0xff]
        %v674 = vld [vmem:[%s4 + $0x8] sm:$0xff]
        %v675 = vld [vmem:[%s10] sm:$0xff]
        %v676 = vld [vmem:[%s10 + $0x8] sm:$0xff]
        %678 = vset.pattern.permute.xlu0 0
        %679 = vperm.xlu0 %678, %v675
        %v680 = vpop.permute.xlu0 %679
        %683 = vset.pattern.permute.xlu0 0
        %684 = vperm.xlu0 %683, %v676
        %v685 = vpop.permute.xlu0 %684
        %vm687 = vcmask 130048
        %v689 = vsel %vm687, %v671, 0
        %v692 = vsel %vm687, %v672, 0
        %694 = vmatprep.subr.mxu0 0.0
        %695 = vmatpush1.msra.mxu0 0.0
        %696 = vmatprep.subr.mxu0 0.0
        %697 = vmatpush1.msra.mxu0 0.0
        %698 = vmatprep.subr.mxu0 0.0
        %699 = vmatpush1.msra.mxu0 0.0
        %700 = vmatprep.subr.mxu0 0.0
        %701 = vmatpush1.msra.mxu0 0.0
        %702 = vmatprep.subr.mxu0 0.0
        %703 = vmatpush1.msra.mxu0 0.0
        %704 = vmatprep.subr.mxu0 0.0
        %705 = vmatpush1.msra.mxu0 0.0
        %706 = vmatprep.subr.mxu0 0.0
        %707 = vmatpush1.msra.mxu0 0.0
        %708 = vmatprep.subr.mxu0 0.0
        %709 = vmatpush1.msra.mxu0 0.0
        %710 = vmatprep.subr.mxu0 0.0
        %711 = vmatpush1.msra.mxu0 0.0
        %712 = vmatprep.subr.mxu0 0.0
        %713 = vmatpush1.msra.mxu0 0.0
        %714 = vmatprep.subr.mxu0 0.0
        %715 = vmatpush1.msra.mxu0 0.0
        %716 = vmatprep.subr.mxu0 0.0
        %717 = vmatpush1.msra.mxu0 0.0
        %718 = vmatprep.subr.mxu0 0.0
        %719 = vmatpush1.msra.mxu0 0.0
        %720 = vmatprep.subr.mxu0 0.0
        %721 = vmatpush1.msra.mxu0 0.0
        %722 = vmatprep.subr.mxu0 0.0
        %723 = vmatpush1.msra.mxu0 %v674
        %724 = vmatprep.subr.mxu0 0.0
        %725 = vmatpush1.msra.mxu0 %v673
        %726 = vmatprep.subr.mxu0 0.0
        %727 = vmatpush2.msra.mxu0 0.0
        %728 = vmatprep.subr.mxu0 0.0
        %729 = vmatpush2.msra.mxu0 0.0
        %730 = vmatprep.subr.mxu0 0.0
        %731 = vmatpush2.msra.mxu0 0.0
        %732 = vmatprep.subr.mxu0 0.0
        %733 = vmatpush2.msra.mxu0 0.0
        %734 = vmatprep.subr.mxu0 0.0
        %735 = vmatpush2.msra.mxu0 0.0
        %736 = vmatprep.subr.mxu0 0.0
        %737 = vmatpush2.msra.mxu0 0.0
        %738 = vmatprep.subr.mxu0 0.0
        %739 = vmatpush2.msra.mxu0 0.0
        %740 = vmatprep.subr.mxu0 0.0
        %741 = vmatpush2.msra.mxu0 0.0
        %742 = vmatprep.subr.mxu0 0.0
        %743 = vmatpush2.msra.mxu0 0.0
        %744 = vmatprep.subr.mxu0 0.0
        %745 = vmatpush2.msra.mxu0 0.0
        %746 = vmatprep.subr.mxu0 0.0
        %747 = vmatpush2.msra.mxu0 0.0
        %748 = vmatprep.subr.mxu0 0.0
        %749 = vmatpush2.msra.mxu0 0.0
        %750 = vmatprep.subr.mxu0 0.0
        %751 = vmatpush2.msra.mxu0 0.0
        %752 = vmatprep.subr.mxu0 0.0
        %753 = vmatpush2.msra.mxu0 0.0
        %754 = vmatprep.subr.mxu0 0.0
        %755 = vmatpush2.msra.mxu0 0.0
        %756 = vmatprep.subr.mxu0 0.0
        %757 = vmatpush2.msra.mxu0 0.0
        %758 = vmatprep.mubr.f32.mxu0 0.0
        %759 = vmatmul.mubr.f32.gmra.mxu0 %v689
        %v760 = vpop.f32.mrf.mxu0
        %v761 = vadd.f32 %v680, %v760
        %v762 = vpop.f32.mrf.mxu0
        %763 = vmatprep.mubr.f32.mxu0 0.0
        %764 = vmatmul.mubr.f32.gmra.mxu0 %v692
        %v765 = vpop.f32.mrf.mxu0
        %v766 = vadd.f32 %v685, %v765
        %v767 = vpop.f32.mrf.mxu0
        %768 = vdwg.mxu0
        %v769 = vtanh.pop %v761
        %v770 = vtanh.pop %v766
        %v771 = vld [vmem:[%s11] sm:$0xff]
        %v772 = vld [vmem:[%s11 + $0x8] sm:$0xff]
        %v773 = vld [vmem:[%s12] sm:$0xff]
        %v774 = vld [vmem:[%s12 + $0x8] sm:$0xff]
        %776 = vset.pattern.permute.xlu0 0
        %777 = vperm.xlu0 %776, %v773
        %v778 = vpop.permute.xlu0 %777
        %781 = vset.pattern.permute.xlu0 0
        %782 = vperm.xlu0 %781, %v774
        %v783 = vpop.permute.xlu0 %782
        %v786 = vsel %vm687, %v771, 0
        %v789 = vsel %vm687, %v772, 0
        %791 = vmatprep.subr.mxu0 0.0
        %792 = vmatpush1.msra.mxu0 0.0
        %793 = vmatprep.subr.mxu0 0.0
        %794 = vmatpush1.msra.mxu0 0.0
        %795 = vmatprep.subr.mxu0 0.0
        %796 = vmatpush1.msra.mxu0 0.0
        %797 = vmatprep.subr.mxu0 0.0
        %798 = vmatpush1.msra.mxu0 0.0
        %799 = vmatprep.subr.mxu0 0.0
        %800 = vmatpush1.msra.mxu0 0.0
        %801 = vmatprep.subr.mxu0 0.0
        %802 = vmatpush1.msra.mxu0 0.0
        %803 = vmatprep.subr.mxu0 0.0
        %804 = vmatpush1.msra.mxu0 0.0
        %805 = vmatprep.subr.mxu0 0.0
        %806 = vmatpush1.msra.mxu0 0.0
        %807 = vmatprep.subr.mxu0 0.0
        %808 = vmatpush1.msra.mxu0 0.0
        %809 = vmatprep.subr.mxu0 0.0
        %810 = vmatpush1.msra.mxu0 0.0
        %811 = vmatprep.subr.mxu0 0.0
        %812 = vmatpush1.msra.mxu0 0.0
        %813 = vmatprep.subr.mxu0 0.0
        %814 = vmatpush1.msra.mxu0 0.0
        %815 = vmatprep.subr.mxu0 0.0
        %816 = vmatpush1.msra.mxu0 0.0
        %817 = vmatprep.subr.mxu0 0.0
        %818 = vmatpush1.msra.mxu0 0.0
        %819 = vmatprep.subr.mxu0 0.0
        %820 = vmatpush1.msra.mxu0 %v770
        %821 = vmatprep.subr.mxu0 0.0
        %822 = vmatpush1.msra.mxu0 %v769
        %823 = vmatprep.subr.mxu0 0.0
        %824 = vmatpush2.msra.mxu0 0.0
        %825 = vmatprep.subr.mxu0 0.0
        %826 = vmatpush2.msra.mxu0 0.0
        %827 = vmatprep.subr.mxu0 0.0
        %828 = vmatpush2.msra.mxu0 0.0
        %829 = vmatprep.subr.mxu0 0.0
        %830 = vmatpush2.msra.mxu0 0.0
        %831 = vmatprep.subr.mxu0 0.0
        %832 = vmatpush2.msra.mxu0 0.0
        %833 = vmatprep.subr.mxu0 0.0
        %834 = vmatpush2.msra.mxu0 0.0
        %835 = vmatprep.subr.mxu0 0.0
        %836 = vmatpush2.msra.mxu0 0.0
        %837 = vmatprep.subr.mxu0 0.0
        %838 = vmatpush2.msra.mxu0 0.0
        %839 = vmatprep.subr.mxu0 0.0
        %840 = vmatpush2.msra.mxu0 0.0
        %841 = vmatprep.subr.mxu0 0.0
        %842 = vmatpush2.msra.mxu0 0.0
        %843 = vmatprep.subr.mxu0 0.0
        %844 = vmatpush2.msra.mxu0 0.0
        %845 = vmatprep.subr.mxu0 0.0
        %846 = vmatpush2.msra.mxu0 0.0
        %847 = vmatprep.subr.mxu0 0.0
        %848 = vmatpush2.msra.mxu0 0.0
        %849 = vmatprep.subr.mxu0 0.0
        %850 = vmatpush2.msra.mxu0 0.0
        %851 = vmatprep.subr.mxu0 0.0
        %852 = vmatpush2.msra.mxu0 0.0
        %853 = vmatprep.subr.mxu0 0.0
        %854 = vmatpush2.msra.mxu0 0.0
        %855 = vmatprep.mubr.f32.mxu0 0.0
        %856 = vmatmul.mubr.f32.gmra.mxu0 %v786
        %v857 = vpop.f32.mrf.mxu0
        %v858 = vadd.f32 %v778, %v857
        %v859 = vpop.f32.mrf.mxu0
        %860 = vmatprep.mubr.f32.mxu0 0.0
        %861 = vmatmul.mubr.f32.gmra.mxu0 %v789
        %v862 = vpop.f32.mrf.mxu0
        %v863 = vadd.f32 %v783, %v862
        %v864 = vpop.f32.mrf.mxu0
        %865 = vdwg.mxu0
        %v866 = vtanh.pop %v858
        %v867 = vtanh.pop %v863
        %868 = vst.msk [vmem:[#allocation2] sm:$0xff] %vm668, %v866
        %869 = vst.msk [vmem:[#allocation2 + $0x8] sm:$0xff] %vm668, %v867
      $region92: #{tpu_custom_call.1} parent=87 // pred_fallthru
        _
      %v870 = vld [vmem:[%s631] sm:$0x1]
      %v871 = vld [vmem:[%s638] sm:$0x1]
      %v872 = vlaneseq
      %v873 = vshrl.u32 %v872, 7
      %v874 = vadd.s32 %v873, 8
      %v875 = vlaneseq
      %v876 = vshrl.u32 %v875, 7
      %v877 = vsub.s32 0, %v876
      %v878 = vrot.slane %v870, %v877
      %vm879 = vcmp.eq.s32.totalorder %v873, %v878
      %vm880 = vcmp.eq.s32.totalorder %v874, %v878
      %v881 = vsel %vm879, 1, 0
      %v882 = vsel %vm880, 1, 0
      %v883 = vcvt.s32.f32 %v881
      %v884 = vcvt.s32.f32 %v882
      %v885 = vlaneseq
      %v886 = vshrl.u32 %v885, 7
      %v887 = vsub.s32 0, %v886
      %v888 = vrot.slane %v871, %v887
      %vm889 = vcmp.eq.s32.totalorder %v873, %v888
      %vm890 = vcmp.eq.s32.totalorder %v874, %v888
      %v891 = vsel %vm889, 1, 0
      %v892 = vsel %vm890, 1, 0
      %v893 = vcvt.s32.f32 %v891
      %v894 = vcvt.s32.f32 %v892
      %v895 = vld [vmem:[%s5] sm:$0x7]
      %v896 = vsub.f32 %v893, %v883
      %v897 = vsub.f32 %v894, %v884
      %v898 = vld [vmem:[%s656] sm:$0x7]
      %vm899 = vcmask 97280
      %v901 = vsel %vm899, %v895, 0
      %vm903 = vcmask 1043456
      %v905 = vsel %vm903, %v897, 0
      %907 = vmatprep.subr.mxu0 0.0
      %908 = vmatpush1.msra.mxu0 0.0
      %909 = vmatprep.subr.mxu0 0.0
      %910 = vmatpush1.msra.mxu0 0.0
      %911 = vmatprep.subr.mxu0 0.0
      %912 = vmatpush1.msra.mxu0 0.0
      %913 = vmatprep.subr.mxu0 0.0
      %914 = vmatpush1.msra.mxu0 0.0
      %915 = vmatprep.subr.mxu0 0.0
      %916 = vmatpush1.msra.mxu0 0.0
      %917 = vmatprep.subr.mxu0 0.0
      %918 = vmatpush1.msra.mxu0 0.0
      %919 = vmatprep.subr.mxu0 0.0
      %920 = vmatpush1.msra.mxu0 0.0
      %921 = vmatprep.subr.mxu0 0.0
      %922 = vmatpush1.msra.mxu0 0.0
      %923 = vmatprep.subr.mxu0 0.0
      %924 = vmatpush1.msra.mxu0 0.0
      %925 = vmatprep.subr.mxu0 0.0
      %926 = vmatpush1.msra.mxu0 0.0
      %927 = vmatprep.subr.mxu0 0.0
      %928 = vmatpush1.msra.mxu0 0.0
      %929 = vmatprep.subr.mxu0 0.0
      %930 = vmatpush1.msra.mxu0 0.0
      %931 = vmatprep.subr.mxu0 0.0
      %932 = vmatpush1.msra.mxu0 0.0
      %933 = vmatprep.subr.mxu0 0.0
      %934 = vmatpush1.msra.mxu0 0.0
      %935 = vmatprep.subr.mxu0 0.0
      %936 = vmatpush1.msra.mxu0 %v905
      %937 = vmatprep.subr.mxu0 0.0
      %938 = vmatpush1.msra.mxu0 %v896
      %939 = vmatprep.subr.mxu0 0.0
      %940 = vmatpush2.msra.mxu0 0.0
      %941 = vmatprep.subr.mxu0 0.0
      %942 = vmatpush2.msra.mxu0 0.0
      %943 = vmatprep.subr.mxu0 0.0
      %944 = vmatpush2.msra.mxu0 0.0
      %945 = vmatprep.subr.mxu0 0.0
      %946 = vmatpush2.msra.mxu0 0.0
      %947 = vmatprep.subr.mxu0 0.0
      %948 = vmatpush2.msra.mxu0 0.0
      %949 = vmatprep.subr.mxu0 0.0
      %950 = vmatpush2.msra.mxu0 0.0
      %951 = vmatprep.subr.mxu0 0.0
      %952 = vmatpush2.msra.mxu0 0.0
      %953 = vmatprep.subr.mxu0 0.0
      %954 = vmatpush2.msra.mxu0 0.0
      %955 = vmatprep.subr.mxu0 0.0
      %956 = vmatpush2.msra.mxu0 0.0
      %957 = vmatprep.subr.mxu0 0.0
      %958 = vmatpush2.msra.mxu0 0.0
      %959 = vmatprep.subr.mxu0 0.0
      %960 = vmatpush2.msra.mxu0 0.0
      %961 = vmatprep.subr.mxu0 0.0
      %962 = vmatpush2.msra.mxu0 0.0
      %963 = vmatprep.subr.mxu0 0.0
      %964 = vmatpush2.msra.mxu0 0.0
      %965 = vmatprep.subr.mxu0 0.0
      %966 = vmatpush2.msra.mxu0 0.0
      %967 = vmatprep.subr.mxu0 0.0
      %968 = vmatpush2.msra.mxu0 0.0
      %969 = vmatprep.subr.mxu0 0.0
      %970 = vmatpush2.msra.mxu0 0.0
      %971 = vmatprep.mubr.f32.mxu0 0.0
      %972 = vmatmul.mubr.f32.gmra.mxu0 %v901
      %v973 = vpop.f32.mrf.mxu0
      %v974 = vadd.f32 %v898, %v973
      %v975 = vpop.f32.mrf.mxu0
      %976 = vdwg.mxu0
      %v977 = vld [vmem:[#allocation2] sm:$0xff]
      %v978 = vld [vmem:[#allocation2 + $0x8] sm:$0xff]
      %v979 = vadd.f32 %v883, %v893
      %v980 = vadd.f32 %v884, %v894
      %v981 = vmul.f32 %v974, %v974
      %vm982 = vcmask 1042432
      %v983 = vsel %vm982, %v981, 0.0
      %v984 = vrot.slane %v983, 4
      %v985 = vadd.f32 %v983, %v984
      %v986 = vrot.slane %v985, 2
      %v987 = vadd.f32 %v985, %v986
      %v988 = vrot.slane %v987, 1
      %v989 = vadd.f32 %v987, %v988
      %v990 = vrsqrt.pop %v989
      %v991 = vmul.f32 %v989, %v990
      %vm992 = vcmp.eq.f32.partialorder %v989, inf
      %v993 = vsel %vm992, %v989, %v991
      %vm994 = vcmp.eq.f32.partialorder %v989, 0.0
      %v995 = vand.u32 %v989, 2147483648
      %v996 = vsel %vm994, %v995, %v993
      %v997 = vld [vmem:[%s6] sm:$0xff]
      %v998 = vld [vmem:[%s6 + $0x8] sm:$0xff]
      %1000 = vset.pattern.permute.xlu0 0
      %1001 = vperm.xlu0 %1000, %v997
      %v1002 = vpop.permute.xlu0 %1001
      %1005 = vset.pattern.permute.xlu0 0
      %1006 = vperm.xlu0 %1005, %v998
      %v1007 = vpop.permute.xlu0 %1006
      %v1009 = vsub.f32 %v996, %v1002
      %v1010 = vsub.f32 %v996, %v1007
      %v1011 = vmul.f32 %v1009, %v1009
      %v1012 = vmul.f32 %v1010, %v1010
      %v1013 = vmul.f32 %v1011, -4.5
      %v1014 = vmul.f32 %v1012, -4.5
      %v1015 = vmul.f32 %v1013, 1.442695
      %v1016 = vpow.pop %v1015
      %v1017 = vmul.f32 %v1014, 1.442695
      %v1018 = vpow.pop %v1017
      %vm1019 = vcmp.lt.f32.partialorder %v996, 5.0
      %v1020 = vmul.f32 %v996, 3.1415927
      %v1021 = vrcp.pop 5.0
      %v1022 = vmul.f32 %v1020, %v1021
      %v1023 = vand.u32 2147483647, %v1022
      %vm1024 = vcmp.le.f32.partialorder %v1023, 0.7853982
      %vm1025 = vcmp.lt.s32.totalorder %v1022, 0
      %v1026 = vand.u32 %v1022, 2139095040
      %v1027 = vshrl.u32 %v1026, 23
      %v1028 = vsub.s32 %v1027, 127
      %v1029 = vand.u32 2147483647, %v1022
      %v1030 = vand.u32 %v1029, 8388607
      %v1031 = vor.u32 %v1030, 8388608
      %v1032 = vsub.s32 0, %v1031
      %v1033 = vadd.s32 %v1028, 1
      %vm1034 = vcmp.gt.s32.totalorder %v1033, 0
      %v1035 = vsel %vm1034, %v1033, 0
      %v1036 = vshrl.u32 %v1035, 5
      %v1037 = vand.u32 %v1035, 31
      %v1038 = vsub.s32 32, %v1037
      %v1039 = vshrl.u32 683565275, %v1038
      %v1040 = vshll.u32 683565275, %v1037
      %v1041 = vshrl.u32 2475754826, %v1038
      %v1042 = vor.u32 %v1040, %v1041
      %v1043 = vshll.u32 2475754826, %v1037
      %v1044 = vshrl.u32 2131351028, %v1038
      %v1045 = vor.u32 %v1043, %v1044
      %v1046 = vshll.u32 2131351028, %v1037
      %v1047 = vshrl.u32 2102212464, %v1038
      %v1048 = vor.u32 %v1046, %v1047
      %v1049 = vshll.u32 2102212464, %v1037
      %v1050 = vshrl.u32 920167782, %v1038
      %v1051 = vor.u32 %v1049, %v1050
      %v1052 = vshll.u32 920167782, %v1037
      %v1053 = vshrl.u32 1326507024, %v1038
      %v1054 = vor.u32 %v1052, %v1053
      %vm1055 = vcmp.lt.s32.totalorder %v1036, 1
      %vm1056 = vcmp.lt.s32.totalorder %v1036, 2
      %vm1057 = vcmp.lt.s32.totalorder %v1036, 3
      %vm1058 = vcmp.lt.s32.totalorder %v1036, 4
      %v1059 = vsel %vm1055, %v1039, %v1042
      %v1060 = vsel %vm1058, %v1048, 2102212464
      %v1061 = vsel %vm1057, %v1045, %v1060
      %v1062 = vsel %vm1056, %v1059, %v1061
      %v1063 = vsel %vm1055, %v1042, %v1045
      %v1064 = vsel %vm1058, %v1051, 920167782
      %v1065 = vsel %vm1057, %v1048, %v1064
      %v1066 = vsel %vm1056, %v1063, %v1065
      %v1067 = vsel %vm1055, %v1045, %v1048
      %v1068 = vsel %vm1058, %v1054, 1326507024
      %v1069 = vsel %vm1057, %v1051, %v1068
      %v1070 = vsel %vm1056, %v1067, %v1069
      %v1071 = vshll.u32 %v1031, 8
      %v1072 = vmul.u32.u64.compose %v1071, %v1070
      %v1073 = vextract.low.u32 %v1072
      %v1074 = vextract.high.u32 %v1072
      %v1075 = vmul.u32.u64.compose %v1071, %v1066
      %v1076 = vextract.low.u32 %v1075
      %v1077 = vextract.high.u32 %v1075
      %v1078 = vmul.u32 %v1071, %v1062
      %v1079 = vadd.s32 %v1074, %v1076
      %vm1080 = vc.u32 %v1074, %v1076
      %v1081 = vadd.s32 %v1077, 1
      %v1082 = vsel %vm1080, %v1081, %v1077
      %v1083 = vadd.s32 %v1078, %v1082
      %v1084 = vadd.s32 %v1083, 536870912
      %v1085 = vshrl.u32 %v1084, 30
      %v1086 = vshll.u32 %v1085, 30
      %v1087 = vsub.s32 %v1083, %v1086
      %vm1088 = vcmp.lt.s32.totalorder %v1087, 0
      %v1089 = vsub.s32 0, %v1087
      %v1090 = vsel %vm1088, %v1089, %v1087
      %v1091 = vclz %v1090
      %v1092 = vsub.s32 %v1091, 2
      %vm1093 = vcmp.gt.s32.totalorder 0, %v1092
      %v1094 = vsel %vm1093, 0, %v1092
      %v1095 = vsub.s32 32, %v1094
      %v1096 = vshll.u32 %v1087, %v1094
      %v1097 = vshrl.u32 %v1079, %v1095
      %v1098 = vor.u32 %v1096, %v1097
      %v1099 = vsub.s32 4294967266, %v1094
      %v1100 = vadd.s32 %v1099, 127
      %v1101 = vshll.u32 %v1100, 23
      %v1102 = vor.u32 4788187, %v1101
      %v1103 = vand.u32 2147483647, %v1102
      %v1105 = vcvt.s32.f32 %v1098
      %v1106 = vmul.f32 %v1105, %v1103
      %v1107 = vxor.u32 %v1106, 2147483648
      %v1108 = vsel %vm1025, %v1107, %v1106
      %v1109 = vsub.s32 4, %v1085
      %v1110 = vsel %vm1025, %v1109, %v1085
      %v1111 = vsel %vm1024, %v1022, %v1108
      %v1112 = vsel %vm1024, 0, %v1110
      %v1113 = vcosq.f32.pop %v1111
      %v1114 = vsinq.f32.pop %v1111
      %vm1115 = vweird.f32 %v1022
      %v1116 = vand.u32 %v1112, 3
      %vm1117 = vcmp.lt.s32.totalorder %v1116, 2
      %vm1118 = vcmp.eq.s32.totalorder %v1116, 0
      %v1119 = vxor.u32 %v1114, 2147483648
      %v1120 = vsel %vm1118, %v1113, %v1119
      %vm1121 = vcmp.eq.s32.totalorder %v1116, 2
      %v1122 = vxor.u32 %v1113, 2147483648
      %v1123 = vsel %vm1121, %v1122, %v1114
      %v1124 = vsel %vm1117, %v1120, %v1123
      %v1125 = vsel %vm1115, nan, %v1124
      %v1126 = vadd.f32 %v1125, 1.0
      %v1127 = vmul.f32 %v1126, 0.5
      %v1128 = vsel %vm1019, %v1127, 0.0
      %v1129 = vld [vmem:[%s7] sm:$0xff]
      %v1130 = vld [vmem:[%s7 + $0x8] sm:$0xff]
      %v1131 = vmul.f32 %v1016, %v1128
      %v1132 = vmul.f32 %v1018, %v1128
      %v1133 = vld [vmem:[%s8] sm:$0xff]
      %v1134 = vld [vmem:[%s8 + $0x8] sm:$0xff]
      %1136 = vset.pattern.permute.xlu0 0
      %1137 = vperm.xlu0 %1136, %v1133
      %v1138 = vpop.permute.xlu0 %1137
      %1141 = vset.pattern.permute.xlu0 0
      %1142 = vperm.xlu0 %1141, %v1134
      %v1143 = vpop.permute.xlu0 %1142
      %vm1145 = vcmask 130048
      %v1147 = vsel %vm1145, %v1129, 0
      %v1150 = vsel %vm1145, %v1130, 0
      %1152 = vmatprep.subr.mxu0 0.0
      %1153 = vmatpush1.msra.mxu0 0.0
      %1154 = vmatprep.subr.mxu0 0.0
      %1155 = vmatpush1.msra.mxu0 0.0
      %1156 = vmatprep.subr.mxu0 0.0
      %1157 = vmatpush1.msra.mxu0 0.0
      %1158 = vmatprep.subr.mxu0 0.0
      %1159 = vmatpush1.msra.mxu0 0.0
      %1160 = vmatprep.subr.mxu0 0.0
      %1161 = vmatpush1.msra.mxu0 0.0
      %1162 = vmatprep.subr.mxu0 0.0
      %1163 = vmatpush1.msra.mxu0 0.0
      %1164 = vmatprep.subr.mxu0 0.0
      %1165 = vmatpush1.msra.mxu0 0.0
      %1166 = vmatprep.subr.mxu0 0.0
      %1167 = vmatpush1.msra.mxu0 0.0
      %1168 = vmatprep.subr.mxu0 0.0
      %1169 = vmatpush1.msra.mxu0 0.0
      %1170 = vmatprep.subr.mxu0 0.0
      %1171 = vmatpush1.msra.mxu0 0.0
      %1172 = vmatprep.subr.mxu0 0.0
      %1173 = vmatpush1.msra.mxu0 0.0
      %1174 = vmatprep.subr.mxu0 0.0
      %1175 = vmatpush1.msra.mxu0 0.0
      %1176 = vmatprep.subr.mxu0 0.0
      %1177 = vmatpush1.msra.mxu0 0.0
      %1178 = vmatprep.subr.mxu0 0.0
      %1179 = vmatpush1.msra.mxu0 0.0
      %1180 = vmatprep.subr.mxu0 0.0
      %1181 = vmatpush1.msra.mxu0 %v1132
      %1182 = vmatprep.subr.mxu0 0.0
      %1183 = vmatpush1.msra.mxu0 %v1131
      %1184 = vmatprep.subr.mxu0 0.0
      %1185 = vmatpush2.msra.mxu0 0.0
      %1186 = vmatprep.subr.mxu0 0.0
      %1187 = vmatpush2.msra.mxu0 0.0
      %1188 = vmatprep.subr.mxu0 0.0
      %1189 = vmatpush2.msra.mxu0 0.0
      %1190 = vmatprep.subr.mxu0 0.0
      %1191 = vmatpush2.msra.mxu0 0.0
      %1192 = vmatprep.subr.mxu0 0.0
      %1193 = vmatpush2.msra.mxu0 0.0
      %1194 = vmatprep.subr.mxu0 0.0
      %1195 = vmatpush2.msra.mxu0 0.0
      %1196 = vmatprep.subr.mxu0 0.0
      %1197 = vmatpush2.msra.mxu0 0.0
      %1198 = vmatprep.subr.mxu0 0.0
      %1199 = vmatpush2.msra.mxu0 0.0
      %1200 = vmatprep.subr.mxu0 0.0
      %1201 = vmatpush2.msra.mxu0 0.0
      %1202 = vmatprep.subr.mxu0 0.0
      %1203 = vmatpush2.msra.mxu0 0.0
      %1204 = vmatprep.subr.mxu0 0.0
      %1205 = vmatpush2.msra.mxu0 0.0
      %1206 = vmatprep.subr.mxu0 0.0
      %1207 = vmatpush2.msra.mxu0 0.0
      %1208 = vmatprep.subr.mxu0 0.0
      %1209 = vmatpush2.msra.mxu0 0.0
      %1210 = vmatprep.subr.mxu0 0.0
      %1211 = vmatpush2.msra.mxu0 0.0
      %1212 = vmatprep.subr.mxu0 0.0
      %1213 = vmatpush2.msra.mxu0 0.0
      %1214 = vmatprep.subr.mxu0 0.0
      %1215 = vmatpush2.msra.mxu0 0.0
      %1216 = vmatprep.mubr.f32.mxu0 0.0
      %1217 = vmatmul.mubr.f32.gmra.mxu0 %v1147
      %v1218 = vpop.f32.mrf.mxu0
      %v1219 = vadd.f32 %v1138, %v1218
      %v1220 = vpop.f32.mrf.mxu0
      %1221 = vmatprep.mubr.f32.mxu0 0.0
      %1222 = vmatmul.mubr.f32.gmra.mxu0 %v1150
      %v1223 = vpop.f32.mrf.mxu0
      %v1224 = vadd.f32 %v1143, %v1223
      %v1225 = vpop.f32.mrf.mxu0
      %1226 = vdwg.mxu0
      %v1228 = vsel %vm899, %v977, 0
      %v1231 = vsel %vm899, %v978, 0
      %v1234 = vsel %vm903, %v980, 0
      %1236 = vmatprep.subr.mxu0 0.0
      %1237 = vmatpush1.msra.mxu0 0.0
      %1238 = vmatprep.subr.mxu0 0.0
      %1239 = vmatpush1.msra.mxu0 0.0
      %1240 = vmatprep.subr.mxu0 0.0
      %1241 = vmatpush1.msra.mxu0 0.0
      %1242 = vmatprep.subr.mxu0 0.0
      %1243 = vmatpush1.msra.mxu0 0.0
      %1244 = vmatprep.subr.mxu0 0.0
      %1245 = vmatpush1.msra.mxu0 0.0
      %1246 = vmatprep.subr.mxu0 0.0
      %1247 = vmatpush1.msra.mxu0 0.0
      %1248 = vmatprep.subr.mxu0 0.0
      %1249 = vmatpush1.msra.mxu0 0.0
      %1250 = vmatprep.subr.mxu0 0.0
      %1251 = vmatpush1.msra.mxu0 0.0
      %1252 = vmatprep.subr.mxu0 0.0
      %1253 = vmatpush1.msra.mxu0 0.0
      %1254 = vmatprep.subr.mxu0 0.0
      %1255 = vmatpush1.msra.mxu0 0.0
      %1256 = vmatprep.subr.mxu0 0.0
      %1257 = vmatpush1.msra.mxu0 0.0
      %1258 = vmatprep.subr.mxu0 0.0
      %1259 = vmatpush1.msra.mxu0 0.0
      %1260 = vmatprep.subr.mxu0 0.0
      %1261 = vmatpush1.msra.mxu0 0.0
      %1262 = vmatprep.subr.mxu0 0.0
      %1263 = vmatpush1.msra.mxu0 0.0
      %1264 = vmatprep.subr.mxu0 0.0
      %1265 = vmatpush1.msra.mxu0 %v1234
      %1266 = vmatprep.subr.mxu0 0.0
      %1267 = vmatpush1.msra.mxu0 %v979
      %1268 = vmatprep.subr.mxu0 0.0
      %1269 = vmatpush2.msra.mxu0 0.0
      %1270 = vmatprep.subr.mxu0 0.0
      %1271 = vmatpush2.msra.mxu0 0.0
      %1272 = vmatprep.subr.mxu0 0.0
      %1273 = vmatpush2.msra.mxu0 0.0
      %1274 = vmatprep.subr.mxu0 0.0
      %1275 = vmatpush2.msra.mxu0 0.0
      %1276 = vmatprep.subr.mxu0 0.0
      %1277 = vmatpush2.msra.mxu0 0.0
      %1278 = vmatprep.subr.mxu0 0.0
      %1279 = vmatpush2.msra.mxu0 0.0
      %1280 = vmatprep.subr.mxu0 0.0
      %1281 = vmatpush2.msra.mxu0 0.0
      %1282 = vmatprep.subr.mxu0 0.0
      %1283 = vmatpush2.msra.mxu0 0.0
      %1284 = vmatprep.subr.mxu0 0.0
      %1285 = vmatpush2.msra.mxu0 0.0
      %1286 = vmatprep.subr.mxu0 0.0
      %1287 = vmatpush2.msra.mxu0 0.0
      %1288 = vmatprep.subr.mxu0 0.0
      %1289 = vmatpush2.msra.mxu0 0.0
      %1290 = vmatprep.subr.mxu0 0.0
      %1291 = vmatpush2.msra.mxu0 0.0
      %1292 = vmatprep.subr.mxu0 0.0
      %1293 = vmatpush2.msra.mxu0 0.0
      %1294 = vmatprep.subr.mxu0 0.0
      %1295 = vmatpush2.msra.mxu0 0.0
      %1296 = vmatprep.subr.mxu0 0.0
      %1297 = vmatpush2.msra.mxu0 0.0
      %1298 = vmatprep.subr.mxu0 0.0
      %1299 = vmatpush2.msra.mxu0 0.0
      %1300 = vmatprep.mubr.f32.mxu0 0.0
      %1301 = vmatmul.mubr.f32.gmra.mxu0 %v1228
      %v1302 = vpop.f32.mrf.mxu0
      %v1303 = vadd.f32 %v1219, %v1302
      %v1304 = vpop.f32.mrf.mxu0
      %1305 = vmatprep.mubr.f32.mxu0 0.0
      %1306 = vmatmul.mubr.f32.gmra.mxu0 %v1231
      %v1307 = vpop.f32.mrf.mxu0
      %v1308 = vadd.f32 %v1224, %v1307
      %v1309 = vpop.f32.mrf.mxu0
      %1310 = vdwg.mxu0
      %v1311 = vld [vmem:[%s13] sm:$0xff]
      %v1312 = vld [vmem:[%s13 + $0x8] sm:$0xff]
      %v1313 = vld [vmem:[%s14] sm:$0xff]
      %v1314 = vld [vmem:[%s14 + $0x8] sm:$0xff]
      %1316 = vset.pattern.permute.xlu0 0
      %1317 = vperm.xlu0 %1316, %v1313
      %v1318 = vpop.permute.xlu0 %1317
      %1321 = vset.pattern.permute.xlu0 0
      %1322 = vperm.xlu0 %1321, %v1314
      %v1323 = vpop.permute.xlu0 %1322
      %v1326 = vsel %vm1145, %v1311, 0
      %v1329 = vsel %vm1145, %v1312, 0
      %1331 = vmatprep.subr.mxu0 0.0
      %1332 = vmatpush1.msra.mxu0 0.0
      %1333 = vmatprep.subr.mxu0 0.0
      %1334 = vmatpush1.msra.mxu0 0.0
      %1335 = vmatprep.subr.mxu0 0.0
      %1336 = vmatpush1.msra.mxu0 0.0
      %1337 = vmatprep.subr.mxu0 0.0
      %1338 = vmatpush1.msra.mxu0 0.0
      %1339 = vmatprep.subr.mxu0 0.0
      %1340 = vmatpush1.msra.mxu0 0.0
      %1341 = vmatprep.subr.mxu0 0.0
      %1342 = vmatpush1.msra.mxu0 0.0
      %1343 = vmatprep.subr.mxu0 0.0
      %1344 = vmatpush1.msra.mxu0 0.0
      %1345 = vmatprep.subr.mxu0 0.0
      %1346 = vmatpush1.msra.mxu0 0.0
      %1347 = vmatprep.subr.mxu0 0.0
      %1348 = vmatpush1.msra.mxu0 0.0
      %1349 = vmatprep.subr.mxu0 0.0
      %1350 = vmatpush1.msra.mxu0 0.0
      %1351 = vmatprep.subr.mxu0 0.0
      %1352 = vmatpush1.msra.mxu0 0.0
      %1353 = vmatprep.subr.mxu0 0.0
      %1354 = vmatpush1.msra.mxu0 0.0
      %1355 = vmatprep.subr.mxu0 0.0
      %1356 = vmatpush1.msra.mxu0 0.0
      %1357 = vmatprep.subr.mxu0 0.0
      %1358 = vmatpush1.msra.mxu0 0.0
      %1359 = vmatprep.subr.mxu0 0.0
      %1360 = vmatpush1.msra.mxu0 %v1308
      %1361 = vmatprep.subr.mxu0 0.0
      %1362 = vmatpush1.msra.mxu0 %v1303
      %1363 = vmatprep.subr.mxu0 0.0
      %1364 = vmatpush2.msra.mxu0 0.0
      %1365 = vmatprep.subr.mxu0 0.0
      %1366 = vmatpush2.msra.mxu0 0.0
      %1367 = vmatprep.subr.mxu0 0.0
      %1368 = vmatpush2.msra.mxu0 0.0
      %1369 = vmatprep.subr.mxu0 0.0
      %1370 = vmatpush2.msra.mxu0 0.0
      %1371 = vmatprep.subr.mxu0 0.0
      %1372 = vmatpush2.msra.mxu0 0.0
      %1373 = vmatprep.subr.mxu0 0.0
      %1374 = vmatpush2.msra.mxu0 0.0
      %1375 = vmatprep.subr.mxu0 0.0
      %1376 = vmatpush2.msra.mxu0 0.0
      %1377 = vmatprep.subr.mxu0 0.0
      %1378 = vmatpush2.msra.mxu0 0.0
      %1379 = vmatprep.subr.mxu0 0.0
      %1380 = vmatpush2.msra.mxu0 0.0
      %1381 = vmatprep.subr.mxu0 0.0
      %1382 = vmatpush2.msra.mxu0 0.0
      %1383 = vmatprep.subr.mxu0 0.0
      %1384 = vmatpush2.msra.mxu0 0.0
      %1385 = vmatprep.subr.mxu0 0.0
      %1386 = vmatpush2.msra.mxu0 0.0
      %1387 = vmatprep.subr.mxu0 0.0
      %1388 = vmatpush2.msra.mxu0 0.0
      %1389 = vmatprep.subr.mxu0 0.0
      %1390 = vmatpush2.msra.mxu0 0.0
      %1391 = vmatprep.subr.mxu0 0.0
      %1392 = vmatpush2.msra.mxu0 0.0
      %1393 = vmatprep.subr.mxu0 0.0
      %1394 = vmatpush2.msra.mxu0 0.0
      %1395 = vmatprep.mubr.f32.mxu0 0.0
      %1396 = vmatmul.mubr.f32.gmra.mxu0 %v1326
      %v1397 = vpop.f32.mrf.mxu0
      %v1398 = vadd.f32 %v1318, %v1397
      %v1399 = vpop.f32.mrf.mxu0
      %1400 = vmatprep.mubr.f32.mxu0 0.0
      %1401 = vmatmul.mubr.f32.gmra.mxu0 %v1329
      %v1402 = vpop.f32.mrf.mxu0
      %v1403 = vadd.f32 %v1323, %v1402
      %v1404 = vpop.f32.mrf.mxu0
      %1405 = vdwg.mxu0
      %v1406 = vtanh.pop %v1398
      %v1407 = vtanh.pop %v1403
      %v1408 = vld [vmem:[%s15] sm:$0xff]
      %v1409 = vld [vmem:[%s15 + $0x8] sm:$0xff]
      %v1410 = vld [vmem:[%s16] sm:$0xff]
      %v1411 = vld [vmem:[%s16 + $0x8] sm:$0xff]
      %1413 = vset.pattern.permute.xlu0 0
      %1414 = vperm.xlu0 %1413, %v1410
      %v1415 = vpop.permute.xlu0 %1414
      %1418 = vset.pattern.permute.xlu0 0
      %1419 = vperm.xlu0 %1418, %v1411
      %v1420 = vpop.permute.xlu0 %1419
      %v1423 = vsel %vm1145, %v1408, 0
      %v1426 = vsel %vm1145, %v1409, 0
      %1428 = vmatprep.subr.mxu0 0.0
      %1429 = vmatpush1.msra.mxu0 0.0
      %1430 = vmatprep.subr.mxu0 0.0
      %1431 = vmatpush1.msra.mxu0 0.0
      %1432 = vmatprep.subr.mxu0 0.0
      %1433 = vmatpush1.msra.mxu0 0.0
      %1434 = vmatprep.subr.mxu0 0.0
      %1435 = vmatpush1.msra.mxu0 0.0
      %1436 = vmatprep.subr.mxu0 0.0
      %1437 = vmatpush1.msra.mxu0 0.0
      %1438 = vmatprep.subr.mxu0 0.0
      %1439 = vmatpush1.msra.mxu0 0.0
      %1440 = vmatprep.subr.mxu0 0.0
      %1441 = vmatpush1.msra.mxu0 0.0
      %1442 = vmatprep.subr.mxu0 0.0
      %1443 = vmatpush1.msra.mxu0 0.0
      %1444 = vmatprep.subr.mxu0 0.0
      %1445 = vmatpush1.msra.mxu0 0.0
      %1446 = vmatprep.subr.mxu0 0.0
      %1447 = vmatpush1.msra.mxu0 0.0
      %1448 = vmatprep.subr.mxu0 0.0
      %1449 = vmatpush1.msra.mxu0 0.0
      %1450 = vmatprep.subr.mxu0 0.0
      %1451 = vmatpush1.msra.mxu0 0.0
      %1452 = vmatprep.subr.mxu0 0.0
      %1453 = vmatpush1.msra.mxu0 0.0
      %1454 = vmatprep.subr.mxu0 0.0
      %1455 = vmatpush1.msra.mxu0 0.0
      %1456 = vmatprep.subr.mxu0 0.0
      %1457 = vmatpush1.msra.mxu0 %v1407
      %1458 = vmatprep.subr.mxu0 0.0
      %1459 = vmatpush1.msra.mxu0 %v1406
      %1460 = vmatprep.subr.mxu0 0.0
      %1461 = vmatpush2.msra.mxu0 0.0
      %1462 = vmatprep.subr.mxu0 0.0
      %1463 = vmatpush2.msra.mxu0 0.0
      %1464 = vmatprep.subr.mxu0 0.0
      %1465 = vmatpush2.msra.mxu0 0.0
      %1466 = vmatprep.subr.mxu0 0.0
      %1467 = vmatpush2.msra.mxu0 0.0
      %1468 = vmatprep.subr.mxu0 0.0
      %1469 = vmatpush2.msra.mxu0 0.0
      %1470 = vmatprep.subr.mxu0 0.0
      %1471 = vmatpush2.msra.mxu0 0.0
      %1472 = vmatprep.subr.mxu0 0.0
      %1473 = vmatpush2.msra.mxu0 0.0
      %1474 = vmatprep.subr.mxu0 0.0
      %1475 = vmatpush2.msra.mxu0 0.0
      %1476 = vmatprep.subr.mxu0 0.0
      %1477 = vmatpush2.msra.mxu0 0.0
      %1478 = vmatprep.subr.mxu0 0.0
      %1479 = vmatpush2.msra.mxu0 0.0
      %1480 = vmatprep.subr.mxu0 0.0
      %1481 = vmatpush2.msra.mxu0 0.0
      %1482 = vmatprep.subr.mxu0 0.0
      %1483 = vmatpush2.msra.mxu0 0.0
      %1484 = vmatprep.subr.mxu0 0.0
      %1485 = vmatpush2.msra.mxu0 0.0
      %1486 = vmatprep.subr.mxu0 0.0
      %1487 = vmatpush2.msra.mxu0 0.0
      %1488 = vmatprep.subr.mxu0 0.0
      %1489 = vmatpush2.msra.mxu0 0.0
      %1490 = vmatprep.subr.mxu0 0.0
      %1491 = vmatpush2.msra.mxu0 0.0
      %1492 = vmatprep.mubr.f32.mxu0 0.0
      %1493 = vmatmul.mubr.f32.gmra.mxu0 %v1423
      %v1494 = vpop.f32.mrf.mxu0
      %v1495 = vadd.f32 %v1415, %v1494
      %v1496 = vpop.f32.mrf.mxu0
      %1497 = vmatprep.mubr.f32.mxu0 0.0
      %1498 = vmatmul.mubr.f32.gmra.mxu0 %v1426
      %v1499 = vpop.f32.mrf.mxu0
      %v1500 = vadd.f32 %v1420, %v1499
      %v1501 = vpop.f32.mrf.mxu0
      %1502 = vdwg.mxu0
      %v1503 = vtanh.pop %v1495
      %v1504 = vtanh.pop %v1500
      %v1505 = vld [vmem:[%s647] sm:$0xff]
      %v1506 = vld [vmem:[%s647 + $0x8] sm:$0xff]
      %v1507 = vld [vmem:[%s647 + $0x10] sm:$0xff]
      %v1508 = vld [vmem:[%s647 + $0x18] sm:$0xff]
      %v1509 = vld [vmem:[%s647 + $0x20] sm:$0xff]
      %v1510 = vld [vmem:[%s647 + $0x28] sm:$0xff]
      %v1511 = vld [vmem:[%s647 + $0x30] sm:$0xff]
      %v1512 = vld [vmem:[%s647 + $0x38] sm:$0xff]
      %v1513 = vld [vmem:[%s647 + $0x40] sm:$0xff]
      %v1514 = vld [vmem:[%s647 + $0x48] sm:$0xff]
      %v1515 = vld [vmem:[%s647 + $0x50] sm:$0xff]
      %v1516 = vld [vmem:[%s647 + $0x58] sm:$0xff]
      %v1517 = vld [vmem:[%s647 + $0x60] sm:$0xff]
      %v1518 = vld [vmem:[%s647 + $0x68] sm:$0xff]
      %v1519 = vld [vmem:[%s647 + $0x70] sm:$0xff]
      %v1520 = vld [vmem:[%s647 + $0x78] sm:$0xff]
      %v1521 = vlaneseq
      %v1522 = vand.u32 %v1521, 127
      %1523 = vset.pattern.permute.xlu0 0
      %1524 = vperm.xlu0 %1523, %v1505
      %v1525 = vpop.permute.xlu0 %1524
      %1526 = vset.pattern.permute.xlu0 0
      %1527 = vperm.xlu0 %1526, %v1506
      %v1528 = vpop.permute.xlu0 %1527
      %1529 = vset.pattern.permute.xlu0 0
      %1530 = vperm.xlu0 %1529, %v1507
      %v1531 = vpop.permute.xlu0 %1530
      %1532 = vset.pattern.permute.xlu0 0
      %1533 = vperm.xlu0 %1532, %v1508
      %v1534 = vpop.permute.xlu0 %1533
      %1535 = vset.pattern.permute.xlu0 0
      %1536 = vperm.xlu0 %1535, %v1509
      %v1537 = vpop.permute.xlu0 %1536
      %1538 = vset.pattern.permute.xlu0 0
      %1539 = vperm.xlu0 %1538, %v1510
      %v1540 = vpop.permute.xlu0 %1539
      %1541 = vset.pattern.permute.xlu0 0
      %1542 = vperm.xlu0 %1541, %v1511
      %v1543 = vpop.permute.xlu0 %1542
      %1544 = vset.pattern.permute.xlu0 0
      %1545 = vperm.xlu0 %1544, %v1512
      %v1546 = vpop.permute.xlu0 %1545
      %1547 = vset.pattern.permute.xlu0 0
      %1548 = vperm.xlu0 %1547, %v1513
      %v1549 = vpop.permute.xlu0 %1548
      %1550 = vset.pattern.permute.xlu0 0
      %1551 = vperm.xlu0 %1550, %v1514
      %v1552 = vpop.permute.xlu0 %1551
      %1553 = vset.pattern.permute.xlu0 0
      %1554 = vperm.xlu0 %1553, %v1515
      %v1555 = vpop.permute.xlu0 %1554
      %1556 = vset.pattern.permute.xlu0 0
      %1557 = vperm.xlu0 %1556, %v1516
      %v1558 = vpop.permute.xlu0 %1557
      %1559 = vset.pattern.permute.xlu0 0
      %1560 = vperm.xlu0 %1559, %v1517
      %v1561 = vpop.permute.xlu0 %1560
      %1562 = vset.pattern.permute.xlu0 0
      %1563 = vperm.xlu0 %1562, %v1518
      %v1564 = vpop.permute.xlu0 %1563
      %1565 = vset.pattern.permute.xlu0 0
      %1566 = vperm.xlu0 %1565, %v1519
      %v1567 = vpop.permute.xlu0 %1566
      %1568 = vset.pattern.permute.xlu0 0
      %1569 = vperm.xlu0 %1568, %v1520
      %v1570 = vpop.permute.xlu0 %1569
      %vm1571 = vcmp.eq.s32.totalorder %v1522, %v1525
      %vm1572 = vcmp.eq.s32.totalorder %v1522, %v1528
      %vm1573 = vcmp.eq.s32.totalorder %v1522, %v1531
      %vm1574 = vcmp.eq.s32.totalorder %v1522, %v1534
      %vm1575 = vcmp.eq.s32.totalorder %v1522, %v1537
      %vm1576 = vcmp.eq.s32.totalorder %v1522, %v1540
      %vm1577 = vcmp.eq.s32.totalorder %v1522, %v1543
      %vm1578 = vcmp.eq.s32.totalorder %v1522, %v1546
      %vm1579 = vcmp.eq.s32.totalorder %v1522, %v1549
      %vm1580 = vcmp.eq.s32.totalorder %v1522, %v1552
      %vm1581 = vcmp.eq.s32.totalorder %v1522, %v1555
      %vm1582 = vcmp.eq.s32.totalorder %v1522, %v1558
      %vm1583 = vcmp.eq.s32.totalorder %v1522, %v1561
      %vm1584 = vcmp.eq.s32.totalorder %v1522, %v1564
      %vm1585 = vcmp.eq.s32.totalorder %v1522, %v1567
      %vm1586 = vcmp.eq.s32.totalorder %v1522, %v1570
      %v1587 = vsel %vm1571, 1, 0
      %v1588 = vsel %vm1572, 1, 0
      %v1589 = vsel %vm1573, 1, 0
      %v1590 = vsel %vm1574, 1, 0
      %v1591 = vsel %vm1575, 1, 0
      %v1592 = vsel %vm1576, 1, 0
      %v1593 = vsel %vm1577, 1, 0
      %v1594 = vsel %vm1578, 1, 0
      %v1595 = vsel %vm1579, 1, 0
      %v1596 = vsel %vm1580, 1, 0
      %v1597 = vsel %vm1581, 1, 0
      %v1598 = vsel %vm1582, 1, 0
      %v1599 = vsel %vm1583, 1, 0
      %v1600 = vsel %vm1584, 1, 0
      %v1601 = vsel %vm1585, 1, 0
      %v1602 = vsel %vm1586, 1, 0
      %v1603 = vcvt.s32.f32 %v1587
      %v1604 = vcvt.s32.f32 %v1588
      %v1605 = vcvt.s32.f32 %v1589
      %v1606 = vcvt.s32.f32 %v1590
      %v1607 = vcvt.s32.f32 %v1591
      %v1608 = vcvt.s32.f32 %v1592
      %v1609 = vcvt.s32.f32 %v1593
      %v1610 = vcvt.s32.f32 %v1594
      %v1611 = vcvt.s32.f32 %v1595
      %v1612 = vcvt.s32.f32 %v1596
      %v1613 = vcvt.s32.f32 %v1597
      %v1614 = vcvt.s32.f32 %v1598
      %v1615 = vcvt.s32.f32 %v1599
      %v1616 = vcvt.s32.f32 %v1600
      %v1617 = vcvt.s32.f32 %v1601
      %v1618 = vcvt.s32.f32 %v1602
      %v1619 = vld [vmem:[%s663] sm:$0xff]
      %v1620 = vld [vmem:[%s663 + $0x8] sm:$0xff]
      %1621 = vmatprep.subr.mxu0 0.0
      %1622 = vmatpush1.msra.mxu0 %v1618
      %1623 = vmatprep.subr.mxu0 0.0
      %1624 = vmatpush1.msra.mxu0 %v1617
      %1625 = vmatprep.subr.mxu0 0.0
      %1626 = vmatpush1.msra.mxu0 %v1616
      %1627 = vmatprep.subr.mxu0 0.0
      %1628 = vmatpush1.msra.mxu0 %v1615
      %1629 = vmatprep.subr.mxu0 0.0
      %1630 = vmatpush1.msra.mxu0 %v1614
      %1631 = vmatprep.subr.mxu0 0.0
      %1632 = vmatpush1.msra.mxu0 %v1613
      %1633 = vmatprep.subr.mxu0 0.0
      %1634 = vmatpush1.msra.mxu0 %v1612
      %1635 = vmatprep.subr.mxu0 0.0
      %1636 = vmatpush1.msra.mxu0 %v1611
      %1637 = vmatprep.subr.mxu0 0.0
      %1638 = vmatpush1.msra.mxu0 %v1610
      %1639 = vmatprep.subr.mxu0 0.0
      %1640 = vmatpush1.msra.mxu0 %v1609
      %1641 = vmatprep.subr.mxu0 0.0
      %1642 = vmatpush1.msra.mxu0 %v1608
      %1643 = vmatprep.subr.mxu0 0.0
      %1644 = vmatpush1.msra.mxu0 %v1607
      %1645 = vmatprep.subr.mxu0 0.0
      %1646 = vmatpush1.msra.mxu0 %v1606
      %1647 = vmatprep.subr.mxu0 0.0
      %1648 = vmatpush1.msra.mxu0 %v1605
      %1649 = vmatprep.subr.mxu0 0.0
      %1650 = vmatpush1.msra.mxu0 %v1604
      %1651 = vmatprep.subr.mxu0 0.0
      %1652 = vmatpush1.msra.mxu0 %v1603
      %1653 = vmatprep.subr.mxu0 0.0
      %1654 = vmatpush2.msra.mxu0 0.0
      %1655 = vmatprep.subr.mxu0 0.0
      %1656 = vmatpush2.msra.mxu0 0.0
      %1657 = vmatprep.subr.mxu0 0.0
      %1658 = vmatpush2.msra.mxu0 0.0
      %1659 = vmatprep.subr.mxu0 0.0
      %1660 = vmatpush2.msra.mxu0 0.0
      %1661 = vmatprep.subr.mxu0 0.0
      %1662 = vmatpush2.msra.mxu0 0.0
      %1663 = vmatprep.subr.mxu0 0.0
      %1664 = vmatpush2.msra.mxu0 0.0
      %1665 = vmatprep.subr.mxu0 0.0
      %1666 = vmatpush2.msra.mxu0 0.0
      %1667 = vmatprep.subr.mxu0 0.0
      %1668 = vmatpush2.msra.mxu0 0.0
      %1669 = vmatprep.subr.mxu0 0.0
      %1670 = vmatpush2.msra.mxu0 0.0
      %1671 = vmatprep.subr.mxu0 0.0
      %1672 = vmatpush2.msra.mxu0 0.0
      %1673 = vmatprep.subr.mxu0 0.0
      %1674 = vmatpush2.msra.mxu0 0.0
      %1675 = vmatprep.subr.mxu0 0.0
      %1676 = vmatpush2.msra.mxu0 0.0
      %1677 = vmatprep.subr.mxu0 0.0
      %1678 = vmatpush2.msra.mxu0 0.0
      %1679 = vmatprep.subr.mxu0 0.0
      %1680 = vmatpush2.msra.mxu0 0.0
      %1681 = vmatprep.subr.mxu0 0.0
      %1682 = vmatpush2.msra.mxu0 0.0
      %1683 = vmatprep.subr.mxu0 0.0
      %1684 = vmatpush2.msra.mxu0 0.0
      %1685 = vmatprep.mubr.f32.mxu0 0.0
      %1686 = vmatmul.mubr.f32.gmra.mxu0 %v1503
      %v1687 = vpop.f32.mrf.mxu0
      %v1688 = vadd.f32 0.0, %v1687
      %v1689 = vpop.f32.mrf.mxu0
      %1690 = vmatprep.mubr.f32.mxu0 0.0
      %1691 = vmatmul.mubr.f32.gmra.mxu0 %v1504
      %v1692 = vpop.f32.mrf.mxu0
      %v1693 = vadd.f32 0.0, %v1692
      %v1694 = vpop.f32.mrf.mxu0
      %1695 = vdwg.mxu0
      %v1696 = vadd.f32 %v1619, %v1688
      %v1697 = vadd.f32 %v1620, %v1693
      %1698 = vst.msk [vmem:[%s663] sm:$0xff] %vm899, %v1696
      %1699 = vst.msk [vmem:[%s663 + $0x8] sm:$0xff] %vm899, %v1697
      %p1700 = scmp.lt.s32.totalorder %s32, 1
      %s1701 = scalar_select %p1700, %s32, 1
      %s1702 = smul.addr %s1701, 2
      %s1703 = smul.addr %s1702, 8
      %s1704 = scalar_lea.vmem %s17, %s1703
      // Predicated region
      $region93: #{tpu_custom_call.1} parent=87 // pred_check
        %p1705 = pneg %p451
      $region94: #{tpu_custom_call.1} parent=87 // pred_check_branch
        %1707 = sbr.rel (%p1705) target = $region96
      $region95: #{tpu_custom_call.1} parent=87 // pred_region
        _
      $region96: #{tpu_custom_call.1} parent=87 // pred_fallthru
        _
    $region88: #{tpu_custom_call.1} parent=5 // pred_fallthru
      _
    %p1708 = scmp.le.s32.totalorder 2, %s23
    // Predicated region
    $region97: #{tpu_custom_call.1} parent=5 // pred_check
      %p1709 = pneg %p1708
    $region98: #{tpu_custom_call.1} parent=5 // pred_check_branch
      %1711 = sbr.rel (%p1709) target = $region100
    $region99: #{tpu_custom_call.1} parent=5 // pred_region
      %s1712 = ssub.s32 %s23, 2
      // Predicated region
      $region101: #{tpu_custom_call.1} parent=99 // pred_check
        %p1713 = pneg %p457
      $region102: #{tpu_custom_call.1} parent=99 // pred_check_branch
        %1715 = sbr.rel (%p1713) target = $region104
      $region103: #{tpu_custom_call.1} parent=99 // pred_region
        %p1716 = scmp.lt.s32.totalorder %s34, 1
        %s1717 = scalar_select %p1716, %s34, 1
        %s1718 = smul.addr %s1717, 2
        %s1719 = smul.addr %s1718, 8
        %s1720 = scalar_lea.vmem %s17, %s1719
      $region104: #{tpu_custom_call.1} parent=99 // pred_fallthru
        _
    $region100: #{tpu_custom_call.1} parent=5 // pred_fallthru
      _
  $region6: #{tpu_custom_call.1} parent=0 // loop_footer
    %s27 = sadd.s32 1, %s23
  $region7: #{tpu_custom_call.1} parent=0 // loop_footer_branch
    %22 = sbr.rel target = $region3
  $region8: #{tpu_custom_call.1} parent=0 // loop_exit
    _

</llo_original>
